<compile_context>
chip_gen: v7x
topology: tpu7x:2x2x1
jax: 0.10.0
libtpu: 0.0.40
codegen_flags: <defaults>
</compile_context>

<pallas_src>
import functools

import jax
import jax.numpy as jnp
import numpy as np
from jax.experimental import pallas as pl
from jax.experimental.pallas import tpu as pltpu


# ----------------------------------------------------------------------------
# Parameter setup (glue, plain JAX)
# ----------------------------------------------------------------------------
def init_params(key, input_dim, count_bins):
    k1, k2, k3, k4 = jax.random.split(key, 4)
    uw = jax.random.normal(k1, (input_dim, count_bins), jnp.float32)
    uh = jax.random.normal(k2, (input_dim, count_bins), jnp.float32)
    ud = jax.random.normal(k3, (input_dim, count_bins - 1), jnp.float32)
    ul = jax.random.uniform(k4, (input_dim, count_bins), jnp.float32)
    return uw, uh, ud, ul


def preprocess_params(uw, uh, ud, ul, *, bound=3.0, min_bin_width=1e-3,
                      min_bin_height=1e-3, min_derivative=1e-3,
                      min_lambda=0.025):
    """Mirror of the PyTorch parameter transforms (softmax/softplus/sigmoid
    plus knot cumsum) in spline_op / _monotonic_rational_spline."""
    K = uw.shape[-1]
    w = jax.nn.softmax(uw, axis=-1)
    h = jax.nn.softmax(uh, axis=-1)
    d = jax.nn.softplus(ud)
    lam = jax.nn.sigmoid(ul)

    w = min_bin_width + (1.0 - min_bin_width * K) * w
    h = min_bin_height + (1.0 - min_bin_height * K) * h
    d = min_derivative + d
    lam = (1.0 - 2.0 * min_lambda) * lam + min_lambda

    def _knots(lengths, lower, upper):
        kn = jnp.cumsum(lengths, axis=-1)
        kn = jnp.pad(kn, ((0, 0), (1, 0)))
        kn = (upper - lower) * kn + lower
        kn = kn.at[..., 0].set(lower)
        kn = kn.at[..., -1].set(upper)
        lengths = kn[..., 1:] - kn[..., :-1]
        return lengths, kn

    w, cw = _knots(w, -bound, bound)
    h, ch = _knots(h, -bound, bound)
    d = jnp.pad(d, ((0, 0), (1, 1)), constant_values=1.0 - min_derivative)
    return w, cw, h, ch, d, lam


# Number of hoisted per-bin tables fed to the kernel.
_NUM_TABLES = 10


def build_spline_tables(params):
    """Hoist every x-independent quantity of the linear rational spline to
    (D, K) tables so the per-element hot path only gathers + evaluates."""
    w, cw, h, ch, d, lam = params
    K = w.shape[-1]
    d0 = d[:, :K]          # derivative at left knot of each bin
    d1 = d[:, 1:]          # derivative at right knot of each bin
    delta = h / w
    wb = jnp.sqrt(d0 / d1)                                   # wa == 1
    wc = (lam * d0 + (1.0 - lam) * wb * d1) / delta
    ya = ch[:, :K]
    yb = h + ya
    yc = ((1.0 - lam) * ya + lam * wb * yb) / ((1.0 - lam) + lam * wb)

    cwl = cw[:, :K]                                          # left knot in x
    wcyc = wc * yc
    wbyb = wb * yb
    dnle = wc * lam * (yc - ya) / w          # derivative num., theta <= lambda
    dngt = wb * wc * (1.0 - lam) * (yb - yc) / w        # theta >  lambda

    tables = jnp.stack(
        [cwl, w, lam, ya, wc, wb, wcyc, wbyb, dnle, dngt], axis=0)
    return cw, tables                  # knots (D, K+1), tables (NT, D, K)


# ----------------------------------------------------------------------------
# Pallas kernel: per-element hot path (bin select + rational + log-det reduce)
# ----------------------------------------------------------------------------
def _spline_kernel(x_ref, knots_ref, tab_ref, u_ref, ld_ref, *,
                   bound, eps, count_bins):
    x = x_ref[...]               # (D, TB)    batch on lanes
    knots = knots_ref[...]       # (D, K+1)   cumulative widths (knots in x)
    tabs = tab_ref[...]          # (NT, D, K) hoisted per-bin tables
    K = count_bins

    # Clipped searchsorted fused with the gather: start from bin 0 and, for
    # each internal knot, overwrite with bin k's values where x >= knot_k + eps
    # (equivalent to clip(searchsorted(cumwidths + eps, x) - 1, 0, K-1)).
    sels = [jnp.broadcast_to(tabs[t, :, 0:1], x.shape)
            for t in range(_NUM_TABLES)]
    for k in range(1, K):
        ge = x >= (knots[:, k:k + 1] + eps)
        for t in range(_NUM_TABLES):
            sels[t] = jnp.where(ge, tabs[t, :, k:k + 1], sels[t])
    (cwl, wsel, lam, ya, wc, wb, wcyc, wbyb, dnle, dngt) = sels

    # Linear-order monotonic rational spline, forward direction (wa == 1).
    theta = (x - cwl) / wsel
    lam_m_theta = lam - theta
    theta_m_lam = -lam_m_theta
    one_m_theta = 1.0 - theta
    le = theta <= lam

    num = jnp.where(le, ya * lam_m_theta + wcyc * theta,
                    wcyc * one_m_theta + wbyb * theta_m_lam)
    den = jnp.where(le, lam_m_theta + wc * theta,
                    wc * one_m_theta + wb * theta_m_lam)
    rden = 1.0 / den
    outputs = num * rden
    dnum = jnp.where(le, dnle, dngt)
    # log(dnum) - 2*log(|den|) fused into a single log (single EUP op).
    logabsdet = jnp.log(dnum * rden * rden)

    # identity outside the tail bound
    inside = (x >= -bound) & (x <= bound)
    outputs = jnp.where(inside, outputs, x)
    logabsdet = jnp.where(inside, logabsdet, 0.0)

    u_ref[...] = outputs
    # reduce over input_dim (sublanes) -> lane-dense (1, TB) slab
    ld_ref[...] = jnp.sum(logabsdet, axis=0, keepdims=True)


def component_wise_spline_forward(x, params, *, bound=3.0, eps=1e-6, tb=256):
    """f: data x (B, D) -> latent u.  Returns (u, log_detJ): (B, D), (B,)."""
    knots, tables = build_spline_tables(params)
    B, D = x.shape
    NT, _, K = tables.shape

    b_pad = ((B + tb - 1) // tb) * tb
    x_t = jnp.transpose(x)                         # (D, B): batch -> lanes
    if b_pad != B:
        x_t = jnp.pad(x_t, ((0, 0), (0, b_pad - B)))
    grid = (b_pad // tb,)

    kernel = functools.partial(_spline_kernel, bound=bound, eps=eps,
                               count_bins=K)
    u_t, ld = pl.pallas_call(
        kernel,
        out_shape=(jax.ShapeDtypeStruct((D, b_pad), x.dtype),
                   jax.ShapeDtypeStruct((1, b_pad), x.dtype)),
        grid=grid,
        in_specs=[
            pl.BlockSpec((D, tb), lambda i: (0, i)),          # x (transposed)
            pl.BlockSpec((D, K + 1), lambda i: (0, 0)),       # knots
            pl.BlockSpec((NT, D, K), lambda i: (0, 0, 0)),    # hoisted tables
        ],
        out_specs=(pl.BlockSpec((D, tb), lambda i: (0, i)),   # u (transposed)
                   pl.BlockSpec((1, tb), lambda i: (0, i))),  # log|detJ|
        compiler_params=pltpu.CompilerParams(
            dimension_semantics=("parallel",)),
        # Tiles are tiny (D x tb fp32 + the (D,K) tables); default scoped VMEM
        # is ample on v5e/v6e/v7x even with double buffering.
    )(x_t, knots, tables)

    return jnp.transpose(u_t[:, :B]), ld[0, :B]


# ----------------------------------------------------------------------------
# Pure-JAX reference (direct transcription of the PyTorch module) for checking
# ----------------------------------------------------------------------------
def reference_forward(x, params, *, bound=3.0, eps=1e-6):
    w, cw, h, ch, d, lam = params
    K = w.shape[-1]
    inside = (x >= -bound) & (x <= bound)
    bin_idx = jnp.sum(x[..., None] >= (cw + eps)[None], axis=-1) - 1
    bin_idx = jnp.clip(bin_idx, 0, K - 1)

    def sel(t):  # (D, Kx) gathered at bin_idx -> (B, D)
        return jnp.take_along_axis(jnp.broadcast_to(t[None], (x.shape[0],) + t.shape),
                                   bin_idx[..., None], axis=-1)[..., 0]

    iw, icw, ich = sel(w), sel(cw[:, :K]), sel(ch[:, :K])
    idelta, ider, iderp1 = sel(h / w), sel(d[:, :K]), sel(d[:, 1:])
    ih, ilam = sel(h), sel(lam)
    wa = 1.0
    wb = jnp.sqrt(ider / iderp1) * wa
    wc = (ilam * wa * ider + (1 - ilam) * wb * iderp1) / idelta
    ya, yb = ich, ih + ich
    yc = ((1 - ilam) * wa * ya + ilam * wb * yb) / ((1 - ilam) * wa + ilam * wb)
    theta = (x - icw) / iw
    le = (theta <= ilam).astype(x.dtype)
    gt = 1.0 - le
    num = (wa * ya * (ilam - theta) + wc * yc * theta) * le + \
          (wc * yc * (1 - theta) + wb * yb * (theta - ilam)) * gt
    den = (wa * (ilam - theta) + wc * theta) * le + \
          (wc * (1 - theta) + wb * (theta - ilam)) * gt
    out = num / den
    dnum = (wa * wc * ilam * (yc - ya) * le + wb * wc * (1 - ilam) * (yb - yc) * gt) / iw
    lad = jnp.log(dnum) - 2 * jnp.log(jnp.abs(den))
    out = jnp.where(inside, out, x)
    lad = jnp.where(inside, lad, 0.0)
    return out, jnp.sum(lad, axis=1)


# ----------------------------------------------------------------------------
if __name__ == "__main__":
    input_dim, count_bins, bound = 8, 8, 3.0

    key = jax.random.PRNGKey(0)
    kp, kx1, kx2 = jax.random.split(key, 3)
    uw, uh, ud, ul = init_params(kp, input_dim, count_bins)
    params = preprocess_params(uw, uh, ud, ul, bound=bound)

    # small batch (single grid step, padded to one lane tile)
    x1 = 2.0 * jax.random.normal(kx1, (16, input_dim), jnp.float32)
    u1, ld1 = component_wise_spline_forward(x1, params, bound=bound, tb=256)
    u1, ld1 = jax.block_until_ready((u1, ld1))
    u1_ref, ld1_ref = reference_forward(x1, params, bound=bound)
    np.testing.assert_allclose(np.asarray(u1), np.asarray(u1_ref),
                               rtol=1e-5, atol=1e-5)
    np.testing.assert_allclose(np.asarray(ld1), np.asarray(ld1_ref),
                               rtol=1e-5, atol=2e-5)

    # multi-tile batch (grid > 1, non-multiple batch exercises padding path)
    x2 = 2.0 * jax.random.normal(kx2, (300, input_dim), jnp.float32)
    u2, ld2 = component_wise_spline_forward(x2, params, bound=bound, tb=128)
    u2, ld2 = jax.block_until_ready((u2, ld2))
    u2_ref, ld2_ref = reference_forward(x2, params, bound=bound)
    np.testing.assert_allclose(np.asarray(u2), np.asarray(u2_ref),
                               rtol=1e-5, atol=1e-5)
    np.testing.assert_allclose(np.asarray(ld2), np.asarray(ld2_ref),
                               rtol=1e-5, atol=2e-5)

    print("KERNEL_OK")
</pallas_src>

<mosaic_0001>
module attributes {stable_mosaic.version = 11 : i64} {
  func.func @_spline_kernel(%arg0: i32, %arg1: memref<8x256xf32, #tpu.memory_space<vmem>>, %arg2: memref<8x9xf32, #tpu.memory_space<vmem>>, %arg3: memref<10x8x8xf32, #tpu.memory_space<vmem>>, %arg4: memref<8x256xf32, #tpu.memory_space<vmem>>, %arg5: memref<1x256xf32, #tpu.memory_space<vmem>>) attributes {dimension_semantics = [#tpu.dimension_semantics<parallel>], iteration_bounds = array<i64: 1>, scalar_prefetch = 0 : i64, scratch_operands = 0 : i64, tpu.core_type = #tpu.core_type<tc>, window_params = [{transform_indices = @transform_0, window_bounds = array<i64: 8, 256>}, {pipeline_mode = #tpu.pipeline_mode<synchronous>, transform_indices = @transform_1, window_bounds = array<i64: 8, 9>}, {pipeline_mode = #tpu.pipeline_mode<synchronous>, transform_indices = @transform_2, window_bounds = array<i64: 10, 8, 8>}, {transform_indices = @transform_3, window_bounds = array<i64: 8, 256>}, {transform_indices = @transform_4, window_bounds = array<i64: 1, 256>}]} {
    %c0 = arith.constant 0 : index
    %c0_0 = arith.constant 0 : index
    %0 = vector.load %arg1[%c0, %c0_0] : memref<8x256xf32, #tpu.memory_space<vmem>>, vector<8x256xf32>
    %c0_1 = arith.constant 0 : index
    %c0_2 = arith.constant 0 : index
    %1 = vector.load %arg2[%c0_1, %c0_2] : memref<8x9xf32, #tpu.memory_space<vmem>>, vector<8x9xf32>
    %c0_3 = arith.constant 0 : index
    %c0_4 = arith.constant 0 : index
    %c0_5 = arith.constant 0 : index
    %2 = vector.load %arg3[%c0_3, %c0_4, %c0_5] : memref<10x8x8xf32, #tpu.memory_space<vmem>>, vector<10x8x8xf32>
    %3 = vector.extract_strided_slice %2 {offsets = [0, 0, 0], sizes = [1, 8, 1], strides = [1, 1, 1]} : vector<10x8x8xf32> to vector<1x8x1xf32>
    %4 = vector.shape_cast %3 : vector<1x8x1xf32> to vector<8x1xf32>
    %5 = vector.shape_cast %4 : vector<8x1xf32> to vector<8x1xf32>
    %6 = vector.broadcast %5 : vector<8x1xf32> to vector<8x256xf32>
    %7 = vector.extract_strided_slice %2 {offsets = [1, 0, 0], sizes = [1, 8, 1], strides = [1, 1, 1]} : vector<10x8x8xf32> to vector<1x8x1xf32>
    %8 = vector.shape_cast %7 : vector<1x8x1xf32> to vector<8x1xf32>
    %9 = vector.shape_cast %8 : vector<8x1xf32> to vector<8x1xf32>
    %10 = vector.broadcast %9 : vector<8x1xf32> to vector<8x256xf32>
    %11 = vector.extract_strided_slice %2 {offsets = [2, 0, 0], sizes = [1, 8, 1], strides = [1, 1, 1]} : vector<10x8x8xf32> to vector<1x8x1xf32>
    %12 = vector.shape_cast %11 : vector<1x8x1xf32> to vector<8x1xf32>
    %13 = vector.shape_cast %12 : vector<8x1xf32> to vector<8x1xf32>
    %14 = vector.broadcast %13 : vector<8x1xf32> to vector<8x256xf32>
    %15 = vector.extract_strided_slice %2 {offsets = [3, 0, 0], sizes = [1, 8, 1], strides = [1, 1, 1]} : vector<10x8x8xf32> to vector<1x8x1xf32>
    %16 = vector.shape_cast %15 : vector<1x8x1xf32> to vector<8x1xf32>
    %17 = vector.shape_cast %16 : vector<8x1xf32> to vector<8x1xf32>
    %18 = vector.broadcast %17 : vector<8x1xf32> to vector<8x256xf32>
    %19 = vector.extract_strided_slice %2 {offsets = [4, 0, 0], sizes = [1, 8, 1], strides = [1, 1, 1]} : vector<10x8x8xf32> to vector<1x8x1xf32>
    %20 = vector.shape_cast %19 : vector<1x8x1xf32> to vector<8x1xf32>
    %21 = vector.shape_cast %20 : vector<8x1xf32> to vector<8x1xf32>
    %22 = vector.broadcast %21 : vector<8x1xf32> to vector<8x256xf32>
    %23 = vector.extract_strided_slice %2 {offsets = [5, 0, 0], sizes = [1, 8, 1], strides = [1, 1, 1]} : vector<10x8x8xf32> to vector<1x8x1xf32>
    %24 = vector.shape_cast %23 : vector<1x8x1xf32> to vector<8x1xf32>
    %25 = vector.shape_cast %24 : vector<8x1xf32> to vector<8x1xf32>
    %26 = vector.broadcast %25 : vector<8x1xf32> to vector<8x256xf32>
    %27 = vector.extract_strided_slice %2 {offsets = [6, 0, 0], sizes = [1, 8, 1], strides = [1, 1, 1]} : vector<10x8x8xf32> to vector<1x8x1xf32>
    %28 = vector.shape_cast %27 : vector<1x8x1xf32> to vector<8x1xf32>
    %29 = vector.shape_cast %28 : vector<8x1xf32> to vector<8x1xf32>
    %30 = vector.broadcast %29 : vector<8x1xf32> to vector<8x256xf32>
    %31 = vector.extract_strided_slice %2 {offsets = [7, 0, 0], sizes = [1, 8, 1], strides = [1, 1, 1]} : vector<10x8x8xf32> to vector<1x8x1xf32>
    %32 = vector.shape_cast %31 : vector<1x8x1xf32> to vector<8x1xf32>
    %33 = vector.shape_cast %32 : vector<8x1xf32> to vector<8x1xf32>
    %34 = vector.broadcast %33 : vector<8x1xf32> to vector<8x256xf32>
    %35 = vector.extract_strided_slice %2 {offsets = [8, 0, 0], sizes = [1, 8, 1], strides = [1, 1, 1]} : vector<10x8x8xf32> to vector<1x8x1xf32>
    %36 = vector.shape_cast %35 : vector<1x8x1xf32> to vector<8x1xf32>
    %37 = vector.shape_cast %36 : vector<8x1xf32> to vector<8x1xf32>
    %38 = vector.broadcast %37 : vector<8x1xf32> to vector<8x256xf32>
    %39 = vector.extract_strided_slice %2 {offsets = [9, 0, 0], sizes = [1, 8, 1], strides = [1, 1, 1]} : vector<10x8x8xf32> to vector<1x8x1xf32>
    %40 = vector.shape_cast %39 : vector<1x8x1xf32> to vector<8x1xf32>
    %41 = vector.shape_cast %40 : vector<8x1xf32> to vector<8x1xf32>
    %42 = vector.broadcast %41 : vector<8x1xf32> to vector<8x256xf32>
    %43 = vector.extract_strided_slice %1 {offsets = [0, 1], sizes = [8, 1], strides = [1, 1]} : vector<8x9xf32> to vector<8x1xf32>
    %cst = arith.constant 9.99999997E-7 : f32
    %44 = vector.broadcast %cst : f32 to vector<8x1xf32>
    %45 = arith.addf %43, %44 : vector<8x1xf32>
    %46 = vector.broadcast %45 : vector<8x1xf32> to vector<8x256xf32>
    %47 = arith.cmpf oge, %0, %46 : vector<8x256xf32>
    %48 = vector.extract_strided_slice %2 {offsets = [0, 0, 1], sizes = [1, 8, 1], strides = [1, 1, 1]} : vector<10x8x8xf32> to vector<1x8x1xf32>
    %49 = vector.shape_cast %48 : vector<1x8x1xf32> to vector<8x1xf32>
    %50 = vector.shape_cast %49 : vector<8x1xf32> to vector<8x1xf32>
    %51 = vector.broadcast %50 : vector<8x1xf32> to vector<8x256xf32>
    %52 = arith.select %47, %51, %6 : vector<8x256xi1>, vector<8x256xf32>
    %53 = vector.extract_strided_slice %2 {offsets = [1, 0, 1], sizes = [1, 8, 1], strides = [1, 1, 1]} : vector<10x8x8xf32> to vector<1x8x1xf32>
    %54 = vector.shape_cast %53 : vector<1x8x1xf32> to vector<8x1xf32>
    %55 = vector.shape_cast %54 : vector<8x1xf32> to vector<8x1xf32>
    %56 = vector.broadcast %55 : vector<8x1xf32> to vector<8x256xf32>
    %57 = arith.select %47, %56, %10 : vector<8x256xi1>, vector<8x256xf32>
    %58 = vector.extract_strided_slice %2 {offsets = [2, 0, 1], sizes = [1, 8, 1], strides = [1, 1, 1]} : vector<10x8x8xf32> to vector<1x8x1xf32>
    %59 = vector.shape_cast %58 : vector<1x8x1xf32> to vector<8x1xf32>
    %60 = vector.shape_cast %59 : vector<8x1xf32> to vector<8x1xf32>
    %61 = vector.broadcast %60 : vector<8x1xf32> to vector<8x256xf32>
    %62 = arith.select %47, %61, %14 : vector<8x256xi1>, vector<8x256xf32>
    %63 = vector.extract_strided_slice %2 {offsets = [3, 0, 1], sizes = [1, 8, 1], strides = [1, 1, 1]} : vector<10x8x8xf32> to vector<1x8x1xf32>
    %64 = vector.shape_cast %63 : vector<1x8x1xf32> to vector<8x1xf32>
    %65 = vector.shape_cast %64 : vector<8x1xf32> to vector<8x1xf32>
    %66 = vector.broadcast %65 : vector<8x1xf32> to vector<8x256xf32>
    %67 = arith.select %47, %66, %18 : vector<8x256xi1>, vector<8x256xf32>
    %68 = vector.extract_strided_slice %2 {offsets = [4, 0, 1], sizes = [1, 8, 1], strides = [1, 1, 1]} : vector<10x8x8xf32> to vector<1x8x1xf32>
    %69 = vector.shape_cast %68 : vector<1x8x1xf32> to vector<8x1xf32>
    %70 = vector.shape_cast %69 : vector<8x1xf32> to vector<8x1xf32>
    %71 = vector.broadcast %70 : vector<8x1xf32> to vector<8x256xf32>
    %72 = arith.select %47, %71, %22 : vector<8x256xi1>, vector<8x256xf32>
    %73 = vector.extract_strided_slice %2 {offsets = [5, 0, 1], sizes = [1, 8, 1], strides = [1, 1, 1]} : vector<10x8x8xf32> to vector<1x8x1xf32>
    %74 = vector.shape_cast %73 : vector<1x8x1xf32> to vector<8x1xf32>
    %75 = vector.shape_cast %74 : vector<8x1xf32> to vector<8x1xf32>
    %76 = vector.broadcast %75 : vector<8x1xf32> to vector<8x256xf32>
    %77 = arith.select %47, %76, %26 : vector<8x256xi1>, vector<8x256xf32>
    %78 = vector.extract_strided_slice %2 {offsets = [6, 0, 1], sizes = [1, 8, 1], strides = [1, 1, 1]} : vector<10x8x8xf32> to vector<1x8x1xf32>
    %79 = vector.shape_cast %78 : vector<1x8x1xf32> to vector<8x1xf32>
    %80 = vector.shape_cast %79 : vector<8x1xf32> to vector<8x1xf32>
    %81 = vector.broadcast %80 : vector<8x1xf32> to vector<8x256xf32>
    %82 = arith.select %47, %81, %30 : vector<8x256xi1>, vector<8x256xf32>
    %83 = vector.extract_strided_slice %2 {offsets = [7, 0, 1], sizes = [1, 8, 1], strides = [1, 1, 1]} : vector<10x8x8xf32> to vector<1x8x1xf32>
    %84 = vector.shape_cast %83 : vector<1x8x1xf32> to vector<8x1xf32>
    %85 = vector.shape_cast %84 : vector<8x1xf32> to vector<8x1xf32>
    %86 = vector.broadcast %85 : vector<8x1xf32> to vector<8x256xf32>
    %87 = arith.select %47, %86, %34 : vector<8x256xi1>, vector<8x256xf32>
    %88 = vector.extract_strided_slice %2 {offsets = [8, 0, 1], sizes = [1, 8, 1], strides = [1, 1, 1]} : vector<10x8x8xf32> to vector<1x8x1xf32>
    %89 = vector.shape_cast %88 : vector<1x8x1xf32> to vector<8x1xf32>
    %90 = vector.shape_cast %89 : vector<8x1xf32> to vector<8x1xf32>
    %91 = vector.broadcast %90 : vector<8x1xf32> to vector<8x256xf32>
    %92 = arith.select %47, %91, %38 : vector<8x256xi1>, vector<8x256xf32>
    %93 = vector.extract_strided_slice %2 {offsets = [9, 0, 1], sizes = [1, 8, 1], strides = [1, 1, 1]} : vector<10x8x8xf32> to vector<1x8x1xf32>
    %94 = vector.shape_cast %93 : vector<1x8x1xf32> to vector<8x1xf32>
    %95 = vector.shape_cast %94 : vector<8x1xf32> to vector<8x1xf32>
    %96 = vector.broadcast %95 : vector<8x1xf32> to vector<8x256xf32>
    %97 = arith.select %47, %96, %42 : vector<8x256xi1>, vector<8x256xf32>
    %98 = vector.extract_strided_slice %1 {offsets = [0, 2], sizes = [8, 1], strides = [1, 1]} : vector<8x9xf32> to vector<8x1xf32>
    %cst_6 = arith.constant 9.99999997E-7 : f32
    %99 = vector.broadcast %cst_6 : f32 to vector<8x1xf32>
    %100 = arith.addf %98, %99 : vector<8x1xf32>
    %101 = vector.broadcast %100 : vector<8x1xf32> to vector<8x256xf32>
    %102 = arith.cmpf oge, %0, %101 : vector<8x256xf32>
    %103 = vector.extract_strided_slice %2 {offsets = [0, 0, 2], sizes = [1, 8, 1], strides = [1, 1, 1]} : vector<10x8x8xf32> to vector<1x8x1xf32>
    %104 = vector.shape_cast %103 : vector<1x8x1xf32> to vector<8x1xf32>
    %105 = vector.shape_cast %104 : vector<8x1xf32> to vector<8x1xf32>
    %106 = vector.broadcast %105 : vector<8x1xf32> to vector<8x256xf32>
    %107 = arith.select %102, %106, %52 : vector<8x256xi1>, vector<8x256xf32>
    %108 = vector.extract_strided_slice %2 {offsets = [1, 0, 2], sizes = [1, 8, 1], strides = [1, 1, 1]} : vector<10x8x8xf32> to vector<1x8x1xf32>
    %109 = vector.shape_cast %108 : vector<1x8x1xf32> to vector<8x1xf32>
    %110 = vector.shape_cast %109 : vector<8x1xf32> to vector<8x1xf32>
    %111 = vector.broadcast %110 : vector<8x1xf32> to vector<8x256xf32>
    %112 = arith.select %102, %111, %57 : vector<8x256xi1>, vector<8x256xf32>
    %113 = vector.extract_strided_slice %2 {offsets = [2, 0, 2], sizes = [1, 8, 1], strides = [1, 1, 1]} : vector<10x8x8xf32> to vector<1x8x1xf32>
    %114 = vector.shape_cast %113 : vector<1x8x1xf32> to vector<8x1xf32>
    %115 = vector.shape_cast %114 : vector<8x1xf32> to vector<8x1xf32>
    %116 = vector.broadcast %115 : vector<8x1xf32> to vector<8x256xf32>
    %117 = arith.select %102, %116, %62 : vector<8x256xi1>, vector<8x256xf32>
    %118 = vector.extract_strided_slice %2 {offsets = [3, 0, 2], sizes = [1, 8, 1], strides = [1, 1, 1]} : vector<10x8x8xf32> to vector<1x8x1xf32>
    %119 = vector.shape_cast %118 : vector<1x8x1xf32> to vector<8x1xf32>
    %120 = vector.shape_cast %119 : vector<8x1xf32> to vector<8x1xf32>
    %121 = vector.broadcast %120 : vector<8x1xf32> to vector<8x256xf32>
    %122 = arith.select %102, %121, %67 : vector<8x256xi1>, vector<8x256xf32>
    %123 = vector.extract_strided_slice %2 {offsets = [4, 0, 2], sizes = [1, 8, 1], strides = [1, 1, 1]} : vector<10x8x8xf32> to vector<1x8x1xf32>
    %124 = vector.shape_cast %123 : vector<1x8x1xf32> to vector<8x1xf32>
    %125 = vector.shape_cast %124 : vector<8x1xf32> to vector<8x1xf32>
    %126 = vector.broadcast %125 : vector<8x1xf32> to vector<8x256xf32>
    %127 = arith.select %102, %126, %72 : vector<8x256xi1>, vector<8x256xf32>
    %128 = vector.extract_strided_slice %2 {offsets = [5, 0, 2], sizes = [1, 8, 1], strides = [1, 1, 1]} : vector<10x8x8xf32> to vector<1x8x1xf32>
    %129 = vector.shape_cast %128 : vector<1x8x1xf32> to vector<8x1xf32>
    %130 = vector.shape_cast %129 : vector<8x1xf32> to vector<8x1xf32>
    %131 = vector.broadcast %130 : vector<8x1xf32> to vector<8x256xf32>
    %132 = arith.select %102, %131, %77 : vector<8x256xi1>, vector<8x256xf32>
    %133 = vector.extract_strided_slice %2 {offsets = [6, 0, 2], sizes = [1, 8, 1], strides = [1, 1, 1]} : vector<10x8x8xf32> to vector<1x8x1xf32>
    %134 = vector.shape_cast %133 : vector<1x8x1xf32> to vector<8x1xf32>
    %135 = vector.shape_cast %134 : vector<8x1xf32> to vector<8x1xf32>
    %136 = vector.broadcast %135 : vector<8x1xf32> to vector<8x256xf32>
    %137 = arith.select %102, %136, %82 : vector<8x256xi1>, vector<8x256xf32>
    %138 = vector.extract_strided_slice %2 {offsets = [7, 0, 2], sizes = [1, 8, 1], strides = [1, 1, 1]} : vector<10x8x8xf32> to vector<1x8x1xf32>
    %139 = vector.shape_cast %138 : vector<1x8x1xf32> to vector<8x1xf32>
    %140 = vector.shape_cast %139 : vector<8x1xf32> to vector<8x1xf32>
    %141 = vector.broadcast %140 : vector<8x1xf32> to vector<8x256xf32>
    %142 = arith.select %102, %141, %87 : vector<8x256xi1>, vector<8x256xf32>
    %143 = vector.extract_strided_slice %2 {offsets = [8, 0, 2], sizes = [1, 8, 1], strides = [1, 1, 1]} : vector<10x8x8xf32> to vector<1x8x1xf32>
    %144 = vector.shape_cast %143 : vector<1x8x1xf32> to vector<8x1xf32>
    %145 = vector.shape_cast %144 : vector<8x1xf32> to vector<8x1xf32>
    %146 = vector.broadcast %145 : vector<8x1xf32> to vector<8x256xf32>
    %147 = arith.select %102, %146, %92 : vector<8x256xi1>, vector<8x256xf32>
    %148 = vector.extract_strided_slice %2 {offsets = [9, 0, 2], sizes = [1, 8, 1], strides = [1, 1, 1]} : vector<10x8x8xf32> to vector<1x8x1xf32>
    %149 = vector.shape_cast %148 : vector<1x8x1xf32> to vector<8x1xf32>
    %150 = vector.shape_cast %149 : vector<8x1xf32> to vector<8x1xf32>
    %151 = vector.broadcast %150 : vector<8x1xf32> to vector<8x256xf32>
    %152 = arith.select %102, %151, %97 : vector<8x256xi1>, vector<8x256xf32>
    %153 = vector.extract_strided_slice %1 {offsets = [0, 3], sizes = [8, 1], strides = [1, 1]} : vector<8x9xf32> to vector<8x1xf32>
    %cst_7 = arith.constant 9.99999997E-7 : f32
    %154 = vector.broadcast %cst_7 : f32 to vector<8x1xf32>
    %155 = arith.addf %153, %154 : vector<8x1xf32>
    %156 = vector.broadcast %155 : vector<8x1xf32> to vector<8x256xf32>
    %157 = arith.cmpf oge, %0, %156 : vector<8x256xf32>
    %158 = vector.extract_strided_slice %2 {offsets = [0, 0, 3], sizes = [1, 8, 1], strides = [1, 1, 1]} : vector<10x8x8xf32> to vector<1x8x1xf32>
    %159 = vector.shape_cast %158 : vector<1x8x1xf32> to vector<8x1xf32>
    %160 = vector.shape_cast %159 : vector<8x1xf32> to vector<8x1xf32>
    %161 = vector.broadcast %160 : vector<8x1xf32> to vector<8x256xf32>
    %162 = arith.select %157, %161, %107 : vector<8x256xi1>, vector<8x256xf32>
    %163 = vector.extract_strided_slice %2 {offsets = [1, 0, 3], sizes = [1, 8, 1], strides = [1, 1, 1]} : vector<10x8x8xf32> to vector<1x8x1xf32>
    %164 = vector.shape_cast %163 : vector<1x8x1xf32> to vector<8x1xf32>
    %165 = vector.shape_cast %164 : vector<8x1xf32> to vector<8x1xf32>
    %166 = vector.broadcast %165 : vector<8x1xf32> to vector<8x256xf32>
    %167 = arith.select %157, %166, %112 : vector<8x256xi1>, vector<8x256xf32>
    %168 = vector.extract_strided_slice %2 {offsets = [2, 0, 3], sizes = [1, 8, 1], strides = [1, 1, 1]} : vector<10x8x8xf32> to vector<1x8x1xf32>
    %169 = vector.shape_cast %168 : vector<1x8x1xf32> to vector<8x1xf32>
    %170 = vector.shape_cast %169 : vector<8x1xf32> to vector<8x1xf32>
    %171 = vector.broadcast %170 : vector<8x1xf32> to vector<8x256xf32>
    %172 = arith.select %157, %171, %117 : vector<8x256xi1>, vector<8x256xf32>
    %173 = vector.extract_strided_slice %2 {offsets = [3, 0, 3], sizes = [1, 8, 1], strides = [1, 1, 1]} : vector<10x8x8xf32> to vector<1x8x1xf32>
    %174 = vector.shape_cast %173 : vector<1x8x1xf32> to vector<8x1xf32>
    %175 = vector.shape_cast %174 : vector<8x1xf32> to vector<8x1xf32>
    %176 = vector.broadcast %175 : vector<8x1xf32> to vector<8x256xf32>
    %177 = arith.select %157, %176, %122 : vector<8x256xi1>, vector<8x256xf32>
    %178 = vector.extract_strided_slice %2 {offsets = [4, 0, 3], sizes = [1, 8, 1], strides = [1, 1, 1]} : vector<10x8x8xf32> to vector<1x8x1xf32>
    %179 = vector.shape_cast %178 : vector<1x8x1xf32> to vector<8x1xf32>
    %180 = vector.shape_cast %179 : vector<8x1xf32> to vector<8x1xf32>
    %181 = vector.broadcast %180 : vector<8x1xf32> to vector<8x256xf32>
    %182 = arith.select %157, %181, %127 : vector<8x256xi1>, vector<8x256xf32>
    %183 = vector.extract_strided_slice %2 {offsets = [5, 0, 3], sizes = [1, 8, 1], strides = [1, 1, 1]} : vector<10x8x8xf32> to vector<1x8x1xf32>
    %184 = vector.shape_cast %183 : vector<1x8x1xf32> to vector<8x1xf32>
    %185 = vector.shape_cast %184 : vector<8x1xf32> to vector<8x1xf32>
    %186 = vector.broadcast %185 : vector<8x1xf32> to vector<8x256xf32>
    %187 = arith.select %157, %186, %132 : vector<8x256xi1>, vector<8x256xf32>
    %188 = vector.extract_strided_slice %2 {offsets = [6, 0, 3], sizes = [1, 8, 1], strides = [1, 1, 1]} : vector<10x8x8xf32> to vector<1x8x1xf32>
    %189 = vector.shape_cast %188 : vector<1x8x1xf32> to vector<8x1xf32>
    %190 = vector.shape_cast %189 : vector<8x1xf32> to vector<8x1xf32>
    %191 = vector.broadcast %190 : vector<8x1xf32> to vector<8x256xf32>
    %192 = arith.select %157, %191, %137 : vector<8x256xi1>, vector<8x256xf32>
    %193 = vector.extract_strided_slice %2 {offsets = [7, 0, 3], sizes = [1, 8, 1], strides = [1, 1, 1]} : vector<10x8x8xf32> to vector<1x8x1xf32>
    %194 = vector.shape_cast %193 : vector<1x8x1xf32> to vector<8x1xf32>
    %195 = vector.shape_cast %194 : vector<8x1xf32> to vector<8x1xf32>
    %196 = vector.broadcast %195 : vector<8x1xf32> to vector<8x256xf32>
    %197 = arith.select %157, %196, %142 : vector<8x256xi1>, vector<8x256xf32>
    %198 = vector.extract_strided_slice %2 {offsets = [8, 0, 3], sizes = [1, 8, 1], strides = [1, 1, 1]} : vector<10x8x8xf32> to vector<1x8x1xf32>
    %199 = vector.shape_cast %198 : vector<1x8x1xf32> to vector<8x1xf32>
    %200 = vector.shape_cast %199 : vector<8x1xf32> to vector<8x1xf32>
    %201 = vector.broadcast %200 : vector<8x1xf32> to vector<8x256xf32>
    %202 = arith.select %157, %201, %147 : vector<8x256xi1>, vector<8x256xf32>
    %203 = vector.extract_strided_slice %2 {offsets = [9, 0, 3], sizes = [1, 8, 1], strides = [1, 1, 1]} : vector<10x8x8xf32> to vector<1x8x1xf32>
    %204 = vector.shape_cast %203 : vector<1x8x1xf32> to vector<8x1xf32>
    %205 = vector.shape_cast %204 : vector<8x1xf32> to vector<8x1xf32>
    %206 = vector.broadcast %205 : vector<8x1xf32> to vector<8x256xf32>
    %207 = arith.select %157, %206, %152 : vector<8x256xi1>, vector<8x256xf32>
    %208 = vector.extract_strided_slice %1 {offsets = [0, 4], sizes = [8, 1], strides = [1, 1]} : vector<8x9xf32> to vector<8x1xf32>
    %cst_8 = arith.constant 9.99999997E-7 : f32
    %209 = vector.broadcast %cst_8 : f32 to vector<8x1xf32>
    %210 = arith.addf %208, %209 : vector<8x1xf32>
    %211 = vector.broadcast %210 : vector<8x1xf32> to vector<8x256xf32>
    %212 = arith.cmpf oge, %0, %211 : vector<8x256xf32>
    %213 = vector.extract_strided_slice %2 {offsets = [0, 0, 4], sizes = [1, 8, 1], strides = [1, 1, 1]} : vector<10x8x8xf32> to vector<1x8x1xf32>
    %214 = vector.shape_cast %213 : vector<1x8x1xf32> to vector<8x1xf32>
    %215 = vector.shape_cast %214 : vector<8x1xf32> to vector<8x1xf32>
    %216 = vector.broadcast %215 : vector<8x1xf32> to vector<8x256xf32>
    %217 = arith.select %212, %216, %162 : vector<8x256xi1>, vector<8x256xf32>
    %218 = vector.extract_strided_slice %2 {offsets = [1, 0, 4], sizes = [1, 8, 1], strides = [1, 1, 1]} : vector<10x8x8xf32> to vector<1x8x1xf32>
    %219 = vector.shape_cast %218 : vector<1x8x1xf32> to vector<8x1xf32>
    %220 = vector.shape_cast %219 : vector<8x1xf32> to vector<8x1xf32>
    %221 = vector.broadcast %220 : vector<8x1xf32> to vector<8x256xf32>
    %222 = arith.select %212, %221, %167 : vector<8x256xi1>, vector<8x256xf32>
    %223 = vector.extract_strided_slice %2 {offsets = [2, 0, 4], sizes = [1, 8, 1], strides = [1, 1, 1]} : vector<10x8x8xf32> to vector<1x8x1xf32>
    %224 = vector.shape_cast %223 : vector<1x8x1xf32> to vector<8x1xf32>
    %225 = vector.shape_cast %224 : vector<8x1xf32> to vector<8x1xf32>
    %226 = vector.broadcast %225 : vector<8x1xf32> to vector<8x256xf32>
    %227 = arith.select %212, %226, %172 : vector<8x256xi1>, vector<8x256xf32>
    %228 = vector.extract_strided_slice %2 {offsets = [3, 0, 4], sizes = [1, 8, 1], strides = [1, 1, 1]} : vector<10x8x8xf32> to vector<1x8x1xf32>
    %229 = vector.shape_cast %228 : vector<1x8x1xf32> to vector<8x1xf32>
    %230 = vector.shape_cast %229 : vector<8x1xf32> to vector<8x1xf32>
    %231 = vector.broadcast %230 : vector<8x1xf32> to vector<8x256xf32>
    %232 = arith.select %212, %231, %177 : vector<8x256xi1>, vector<8x256xf32>
    %233 = vector.extract_strided_slice %2 {offsets = [4, 0, 4], sizes = [1, 8, 1], strides = [1, 1, 1]} : vector<10x8x8xf32> to vector<1x8x1xf32>
    %234 = vector.shape_cast %233 : vector<1x8x1xf32> to vector<8x1xf32>
    %235 = vector.shape_cast %234 : vector<8x1xf32> to vector<8x1xf32>
    %236 = vector.broadcast %235 : vector<8x1xf32> to vector<8x256xf32>
    %237 = arith.select %212, %236, %182 : vector<8x256xi1>, vector<8x256xf32>
    %238 = vector.extract_strided_slice %2 {offsets = [5, 0, 4], sizes = [1, 8, 1], strides = [1, 1, 1]} : vector<10x8x8xf32> to vector<1x8x1xf32>
    %239 = vector.shape_cast %238 : vector<1x8x1xf32> to vector<8x1xf32>
    %240 = vector.shape_cast %239 : vector<8x1xf32> to vector<8x1xf32>
    %241 = vector.broadcast %240 : vector<8x1xf32> to vector<8x256xf32>
    %242 = arith.select %212, %241, %187 : vector<8x256xi1>, vector<8x256xf32>
    %243 = vector.extract_strided_slice %2 {offsets = [6, 0, 4], sizes = [1, 8, 1], strides = [1, 1, 1]} : vector<10x8x8xf32> to vector<1x8x1xf32>
    %244 = vector.shape_cast %243 : vector<1x8x1xf32> to vector<8x1xf32>
    %245 = vector.shape_cast %244 : vector<8x1xf32> to vector<8x1xf32>
    %246 = vector.broadcast %245 : vector<8x1xf32> to vector<8x256xf32>
    %247 = arith.select %212, %246, %192 : vector<8x256xi1>, vector<8x256xf32>
    %248 = vector.extract_strided_slice %2 {offsets = [7, 0, 4], sizes = [1, 8, 1], strides = [1, 1, 1]} : vector<10x8x8xf32> to vector<1x8x1xf32>
    %249 = vector.shape_cast %248 : vector<1x8x1xf32> to vector<8x1xf32>
    %250 = vector.shape_cast %249 : vector<8x1xf32> to vector<8x1xf32>
    %251 = vector.broadcast %250 : vector<8x1xf32> to vector<8x256xf32>
    %252 = arith.select %212, %251, %197 : vector<8x256xi1>, vector<8x256xf32>
    %253 = vector.extract_strided_slice %2 {offsets = [8, 0, 4], sizes = [1, 8, 1], strides = [1, 1, 1]} : vector<10x8x8xf32> to vector<1x8x1xf32>
    %254 = vector.shape_cast %253 : vector<1x8x1xf32> to vector<8x1xf32>
    %255 = vector.shape_cast %254 : vector<8x1xf32> to vector<8x1xf32>
    %256 = vector.broadcast %255 : vector<8x1xf32> to vector<8x256xf32>
    %257 = arith.select %212, %256, %202 : vector<8x256xi1>, vector<8x256xf32>
    %258 = vector.extract_strided_slice %2 {offsets = [9, 0, 4], sizes = [1, 8, 1], strides = [1, 1, 1]} : vector<10x8x8xf32> to vector<1x8x1xf32>
    %259 = vector.shape_cast %258 : vector<1x8x1xf32> to vector<8x1xf32>
    %260 = vector.shape_cast %259 : vector<8x1xf32> to vector<8x1xf32>
    %261 = vector.broadcast %260 : vector<8x1xf32> to vector<8x256xf32>
    %262 = arith.select %212, %261, %207 : vector<8x256xi1>, vector<8x256xf32>
    %263 = vector.extract_strided_slice %1 {offsets = [0, 5], sizes = [8, 1], strides = [1, 1]} : vector<8x9xf32> to vector<8x1xf32>
    %cst_9 = arith.constant 9.99999997E-7 : f32
    %264 = vector.broadcast %cst_9 : f32 to vector<8x1xf32>
    %265 = arith.addf %263, %264 : vector<8x1xf32>
    %266 = vector.broadcast %265 : vector<8x1xf32> to vector<8x256xf32>
    %267 = arith.cmpf oge, %0, %266 : vector<8x256xf32>
    %268 = vector.extract_strided_slice %2 {offsets = [0, 0, 5], sizes = [1, 8, 1], strides = [1, 1, 1]} : vector<10x8x8xf32> to vector<1x8x1xf32>
    %269 = vector.shape_cast %268 : vector<1x8x1xf32> to vector<8x1xf32>
    %270 = vector.shape_cast %269 : vector<8x1xf32> to vector<8x1xf32>
    %271 = vector.broadcast %270 : vector<8x1xf32> to vector<8x256xf32>
    %272 = arith.select %267, %271, %217 : vector<8x256xi1>, vector<8x256xf32>
    %273 = vector.extract_strided_slice %2 {offsets = [1, 0, 5], sizes = [1, 8, 1], strides = [1, 1, 1]} : vector<10x8x8xf32> to vector<1x8x1xf32>
    %274 = vector.shape_cast %273 : vector<1x8x1xf32> to vector<8x1xf32>
    %275 = vector.shape_cast %274 : vector<8x1xf32> to vector<8x1xf32>
    %276 = vector.broadcast %275 : vector<8x1xf32> to vector<8x256xf32>
    %277 = arith.select %267, %276, %222 : vector<8x256xi1>, vector<8x256xf32>
    %278 = vector.extract_strided_slice %2 {offsets = [2, 0, 5], sizes = [1, 8, 1], strides = [1, 1, 1]} : vector<10x8x8xf32> to vector<1x8x1xf32>
    %279 = vector.shape_cast %278 : vector<1x8x1xf32> to vector<8x1xf32>
    %280 = vector.shape_cast %279 : vector<8x1xf32> to vector<8x1xf32>
    %281 = vector.broadcast %280 : vector<8x1xf32> to vector<8x256xf32>
    %282 = arith.select %267, %281, %227 : vector<8x256xi1>, vector<8x256xf32>
    %283 = vector.extract_strided_slice %2 {offsets = [3, 0, 5], sizes = [1, 8, 1], strides = [1, 1, 1]} : vector<10x8x8xf32> to vector<1x8x1xf32>
    %284 = vector.shape_cast %283 : vector<1x8x1xf32> to vector<8x1xf32>
    %285 = vector.shape_cast %284 : vector<8x1xf32> to vector<8x1xf32>
    %286 = vector.broadcast %285 : vector<8x1xf32> to vector<8x256xf32>
    %287 = arith.select %267, %286, %232 : vector<8x256xi1>, vector<8x256xf32>
    %288 = vector.extract_strided_slice %2 {offsets = [4, 0, 5], sizes = [1, 8, 1], strides = [1, 1, 1]} : vector<10x8x8xf32> to vector<1x8x1xf32>
    %289 = vector.shape_cast %288 : vector<1x8x1xf32> to vector<8x1xf32>
    %290 = vector.shape_cast %289 : vector<8x1xf32> to vector<8x1xf32>
    %291 = vector.broadcast %290 : vector<8x1xf32> to vector<8x256xf32>
    %292 = arith.select %267, %291, %237 : vector<8x256xi1>, vector<8x256xf32>
    %293 = vector.extract_strided_slice %2 {offsets = [5, 0, 5], sizes = [1, 8, 1], strides = [1, 1, 1]} : vector<10x8x8xf32> to vector<1x8x1xf32>
    %294 = vector.shape_cast %293 : vector<1x8x1xf32> to vector<8x1xf32>
    %295 = vector.shape_cast %294 : vector<8x1xf32> to vector<8x1xf32>
    %296 = vector.broadcast %295 : vector<8x1xf32> to vector<8x256xf32>
    %297 = arith.select %267, %296, %242 : vector<8x256xi1>, vector<8x256xf32>
    %298 = vector.extract_strided_slice %2 {offsets = [6, 0, 5], sizes = [1, 8, 1], strides = [1, 1, 1]} : vector<10x8x8xf32> to vector<1x8x1xf32>
    %299 = vector.shape_cast %298 : vector<1x8x1xf32> to vector<8x1xf32>
    %300 = vector.shape_cast %299 : vector<8x1xf32> to vector<8x1xf32>
    %301 = vector.broadcast %300 : vector<8x1xf32> to vector<8x256xf32>
    %302 = arith.select %267, %301, %247 : vector<8x256xi1>, vector<8x256xf32>
    %303 = vector.extract_strided_slice %2 {offsets = [7, 0, 5], sizes = [1, 8, 1], strides = [1, 1, 1]} : vector<10x8x8xf32> to vector<1x8x1xf32>
    %304 = vector.shape_cast %303 : vector<1x8x1xf32> to vector<8x1xf32>
    %305 = vector.shape_cast %304 : vector<8x1xf32> to vector<8x1xf32>
    %306 = vector.broadcast %305 : vector<8x1xf32> to vector<8x256xf32>
    %307 = arith.select %267, %306, %252 : vector<8x256xi1>, vector<8x256xf32>
    %308 = vector.extract_strided_slice %2 {offsets = [8, 0, 5], sizes = [1, 8, 1], strides = [1, 1, 1]} : vector<10x8x8xf32> to vector<1x8x1xf32>
    %309 = vector.shape_cast %308 : vector<1x8x1xf32> to vector<8x1xf32>
    %310 = vector.shape_cast %309 : vector<8x1xf32> to vector<8x1xf32>
    %311 = vector.broadcast %310 : vector<8x1xf32> to vector<8x256xf32>
    %312 = arith.select %267, %311, %257 : vector<8x256xi1>, vector<8x256xf32>
    %313 = vector.extract_strided_slice %2 {offsets = [9, 0, 5], sizes = [1, 8, 1], strides = [1, 1, 1]} : vector<10x8x8xf32> to vector<1x8x1xf32>
    %314 = vector.shape_cast %313 : vector<1x8x1xf32> to vector<8x1xf32>
    %315 = vector.shape_cast %314 : vector<8x1xf32> to vector<8x1xf32>
    %316 = vector.broadcast %315 : vector<8x1xf32> to vector<8x256xf32>
    %317 = arith.select %267, %316, %262 : vector<8x256xi1>, vector<8x256xf32>
    %318 = vector.extract_strided_slice %1 {offsets = [0, 6], sizes = [8, 1], strides = [1, 1]} : vector<8x9xf32> to vector<8x1xf32>
    %cst_10 = arith.constant 9.99999997E-7 : f32
    %319 = vector.broadcast %cst_10 : f32 to vector<8x1xf32>
    %320 = arith.addf %318, %319 : vector<8x1xf32>
    %321 = vector.broadcast %320 : vector<8x1xf32> to vector<8x256xf32>
    %322 = arith.cmpf oge, %0, %321 : vector<8x256xf32>
    %323 = vector.extract_strided_slice %2 {offsets = [0, 0, 6], sizes = [1, 8, 1], strides = [1, 1, 1]} : vector<10x8x8xf32> to vector<1x8x1xf32>
    %324 = vector.shape_cast %323 : vector<1x8x1xf32> to vector<8x1xf32>
    %325 = vector.shape_cast %324 : vector<8x1xf32> to vector<8x1xf32>
    %326 = vector.broadcast %325 : vector<8x1xf32> to vector<8x256xf32>
    %327 = arith.select %322, %326, %272 : vector<8x256xi1>, vector<8x256xf32>
    %328 = vector.extract_strided_slice %2 {offsets = [1, 0, 6], sizes = [1, 8, 1], strides = [1, 1, 1]} : vector<10x8x8xf32> to vector<1x8x1xf32>
    %329 = vector.shape_cast %328 : vector<1x8x1xf32> to vector<8x1xf32>
    %330 = vector.shape_cast %329 : vector<8x1xf32> to vector<8x1xf32>
    %331 = vector.broadcast %330 : vector<8x1xf32> to vector<8x256xf32>
    %332 = arith.select %322, %331, %277 : vector<8x256xi1>, vector<8x256xf32>
    %333 = vector.extract_strided_slice %2 {offsets = [2, 0, 6], sizes = [1, 8, 1], strides = [1, 1, 1]} : vector<10x8x8xf32> to vector<1x8x1xf32>
    %334 = vector.shape_cast %333 : vector<1x8x1xf32> to vector<8x1xf32>
    %335 = vector.shape_cast %334 : vector<8x1xf32> to vector<8x1xf32>
    %336 = vector.broadcast %335 : vector<8x1xf32> to vector<8x256xf32>
    %337 = arith.select %322, %336, %282 : vector<8x256xi1>, vector<8x256xf32>
    %338 = vector.extract_strided_slice %2 {offsets = [3, 0, 6], sizes = [1, 8, 1], strides = [1, 1, 1]} : vector<10x8x8xf32> to vector<1x8x1xf32>
    %339 = vector.shape_cast %338 : vector<1x8x1xf32> to vector<8x1xf32>
    %340 = vector.shape_cast %339 : vector<8x1xf32> to vector<8x1xf32>
    %341 = vector.broadcast %340 : vector<8x1xf32> to vector<8x256xf32>
    %342 = arith.select %322, %341, %287 : vector<8x256xi1>, vector<8x256xf32>
    %343 = vector.extract_strided_slice %2 {offsets = [4, 0, 6], sizes = [1, 8, 1], strides = [1, 1, 1]} : vector<10x8x8xf32> to vector<1x8x1xf32>
    %344 = vector.shape_cast %343 : vector<1x8x1xf32> to vector<8x1xf32>
    %345 = vector.shape_cast %344 : vector<8x1xf32> to vector<8x1xf32>
    %346 = vector.broadcast %345 : vector<8x1xf32> to vector<8x256xf32>
    %347 = arith.select %322, %346, %292 : vector<8x256xi1>, vector<8x256xf32>
    %348 = vector.extract_strided_slice %2 {offsets = [5, 0, 6], sizes = [1, 8, 1], strides = [1, 1, 1]} : vector<10x8x8xf32> to vector<1x8x1xf32>
    %349 = vector.shape_cast %348 : vector<1x8x1xf32> to vector<8x1xf32>
    %350 = vector.shape_cast %349 : vector<8x1xf32> to vector<8x1xf32>
    %351 = vector.broadcast %350 : vector<8x1xf32> to vector<8x256xf32>
    %352 = arith.select %322, %351, %297 : vector<8x256xi1>, vector<8x256xf32>
    %353 = vector.extract_strided_slice %2 {offsets = [6, 0, 6], sizes = [1, 8, 1], strides = [1, 1, 1]} : vector<10x8x8xf32> to vector<1x8x1xf32>
    %354 = vector.shape_cast %353 : vector<1x8x1xf32> to vector<8x1xf32>
    %355 = vector.shape_cast %354 : vector<8x1xf32> to vector<8x1xf32>
    %356 = vector.broadcast %355 : vector<8x1xf32> to vector<8x256xf32>
    %357 = arith.select %322, %356, %302 : vector<8x256xi1>, vector<8x256xf32>
    %358 = vector.extract_strided_slice %2 {offsets = [7, 0, 6], sizes = [1, 8, 1], strides = [1, 1, 1]} : vector<10x8x8xf32> to vector<1x8x1xf32>
    %359 = vector.shape_cast %358 : vector<1x8x1xf32> to vector<8x1xf32>
    %360 = vector.shape_cast %359 : vector<8x1xf32> to vector<8x1xf32>
    %361 = vector.broadcast %360 : vector<8x1xf32> to vector<8x256xf32>
    %362 = arith.select %322, %361, %307 : vector<8x256xi1>, vector<8x256xf32>
    %363 = vector.extract_strided_slice %2 {offsets = [8, 0, 6], sizes = [1, 8, 1], strides = [1, 1, 1]} : vector<10x8x8xf32> to vector<1x8x1xf32>
    %364 = vector.shape_cast %363 : vector<1x8x1xf32> to vector<8x1xf32>
    %365 = vector.shape_cast %364 : vector<8x1xf32> to vector<8x1xf32>
    %366 = vector.broadcast %365 : vector<8x1xf32> to vector<8x256xf32>
    %367 = arith.select %322, %366, %312 : vector<8x256xi1>, vector<8x256xf32>
    %368 = vector.extract_strided_slice %2 {offsets = [9, 0, 6], sizes = [1, 8, 1], strides = [1, 1, 1]} : vector<10x8x8xf32> to vector<1x8x1xf32>
    %369 = vector.shape_cast %368 : vector<1x8x1xf32> to vector<8x1xf32>
    %370 = vector.shape_cast %369 : vector<8x1xf32> to vector<8x1xf32>
    %371 = vector.broadcast %370 : vector<8x1xf32> to vector<8x256xf32>
    %372 = arith.select %322, %371, %317 : vector<8x256xi1>, vector<8x256xf32>
    %373 = vector.extract_strided_slice %1 {offsets = [0, 7], sizes = [8, 1], strides = [1, 1]} : vector<8x9xf32> to vector<8x1xf32>
    %cst_11 = arith.constant 9.99999997E-7 : f32
    %374 = vector.broadcast %cst_11 : f32 to vector<8x1xf32>
    %375 = arith.addf %373, %374 : vector<8x1xf32>
    %376 = vector.broadcast %375 : vector<8x1xf32> to vector<8x256xf32>
    %377 = arith.cmpf oge, %0, %376 : vector<8x256xf32>
    %378 = vector.extract_strided_slice %2 {offsets = [0, 0, 7], sizes = [1, 8, 1], strides = [1, 1, 1]} : vector<10x8x8xf32> to vector<1x8x1xf32>
    %379 = vector.shape_cast %378 : vector<1x8x1xf32> to vector<8x1xf32>
    %380 = vector.shape_cast %379 : vector<8x1xf32> to vector<8x1xf32>
    %381 = vector.broadcast %380 : vector<8x1xf32> to vector<8x256xf32>
    %382 = arith.select %377, %381, %327 : vector<8x256xi1>, vector<8x256xf32>
    %383 = vector.extract_strided_slice %2 {offsets = [1, 0, 7], sizes = [1, 8, 1], strides = [1, 1, 1]} : vector<10x8x8xf32> to vector<1x8x1xf32>
    %384 = vector.shape_cast %383 : vector<1x8x1xf32> to vector<8x1xf32>
    %385 = vector.shape_cast %384 : vector<8x1xf32> to vector<8x1xf32>
    %386 = vector.broadcast %385 : vector<8x1xf32> to vector<8x256xf32>
    %387 = arith.select %377, %386, %332 : vector<8x256xi1>, vector<8x256xf32>
    %388 = vector.extract_strided_slice %2 {offsets = [2, 0, 7], sizes = [1, 8, 1], strides = [1, 1, 1]} : vector<10x8x8xf32> to vector<1x8x1xf32>
    %389 = vector.shape_cast %388 : vector<1x8x1xf32> to vector<8x1xf32>
    %390 = vector.shape_cast %389 : vector<8x1xf32> to vector<8x1xf32>
    %391 = vector.broadcast %390 : vector<8x1xf32> to vector<8x256xf32>
    %392 = arith.select %377, %391, %337 : vector<8x256xi1>, vector<8x256xf32>
    %393 = vector.extract_strided_slice %2 {offsets = [3, 0, 7], sizes = [1, 8, 1], strides = [1, 1, 1]} : vector<10x8x8xf32> to vector<1x8x1xf32>
    %394 = vector.shape_cast %393 : vector<1x8x1xf32> to vector<8x1xf32>
    %395 = vector.shape_cast %394 : vector<8x1xf32> to vector<8x1xf32>
    %396 = vector.broadcast %395 : vector<8x1xf32> to vector<8x256xf32>
    %397 = arith.select %377, %396, %342 : vector<8x256xi1>, vector<8x256xf32>
    %398 = vector.extract_strided_slice %2 {offsets = [4, 0, 7], sizes = [1, 8, 1], strides = [1, 1, 1]} : vector<10x8x8xf32> to vector<1x8x1xf32>
    %399 = vector.shape_cast %398 : vector<1x8x1xf32> to vector<8x1xf32>
    %400 = vector.shape_cast %399 : vector<8x1xf32> to vector<8x1xf32>
    %401 = vector.broadcast %400 : vector<8x1xf32> to vector<8x256xf32>
    %402 = arith.select %377, %401, %347 : vector<8x256xi1>, vector<8x256xf32>
    %403 = vector.extract_strided_slice %2 {offsets = [5, 0, 7], sizes = [1, 8, 1], strides = [1, 1, 1]} : vector<10x8x8xf32> to vector<1x8x1xf32>
    %404 = vector.shape_cast %403 : vector<1x8x1xf32> to vector<8x1xf32>
    %405 = vector.shape_cast %404 : vector<8x1xf32> to vector<8x1xf32>
    %406 = vector.broadcast %405 : vector<8x1xf32> to vector<8x256xf32>
    %407 = arith.select %377, %406, %352 : vector<8x256xi1>, vector<8x256xf32>
    %408 = vector.extract_strided_slice %2 {offsets = [6, 0, 7], sizes = [1, 8, 1], strides = [1, 1, 1]} : vector<10x8x8xf32> to vector<1x8x1xf32>
    %409 = vector.shape_cast %408 : vector<1x8x1xf32> to vector<8x1xf32>
    %410 = vector.shape_cast %409 : vector<8x1xf32> to vector<8x1xf32>
    %411 = vector.broadcast %410 : vector<8x1xf32> to vector<8x256xf32>
    %412 = arith.select %377, %411, %357 : vector<8x256xi1>, vector<8x256xf32>
    %413 = vector.extract_strided_slice %2 {offsets = [7, 0, 7], sizes = [1, 8, 1], strides = [1, 1, 1]} : vector<10x8x8xf32> to vector<1x8x1xf32>
    %414 = vector.shape_cast %413 : vector<1x8x1xf32> to vector<8x1xf32>
    %415 = vector.shape_cast %414 : vector<8x1xf32> to vector<8x1xf32>
    %416 = vector.broadcast %415 : vector<8x1xf32> to vector<8x256xf32>
    %417 = arith.select %377, %416, %362 : vector<8x256xi1>, vector<8x256xf32>
    %418 = vector.extract_strided_slice %2 {offsets = [8, 0, 7], sizes = [1, 8, 1], strides = [1, 1, 1]} : vector<10x8x8xf32> to vector<1x8x1xf32>
    %419 = vector.shape_cast %418 : vector<1x8x1xf32> to vector<8x1xf32>
    %420 = vector.shape_cast %419 : vector<8x1xf32> to vector<8x1xf32>
    %421 = vector.broadcast %420 : vector<8x1xf32> to vector<8x256xf32>
    %422 = arith.select %377, %421, %367 : vector<8x256xi1>, vector<8x256xf32>
    %423 = vector.extract_strided_slice %2 {offsets = [9, 0, 7], sizes = [1, 8, 1], strides = [1, 1, 1]} : vector<10x8x8xf32> to vector<1x8x1xf32>
    %424 = vector.shape_cast %423 : vector<1x8x1xf32> to vector<8x1xf32>
    %425 = vector.shape_cast %424 : vector<8x1xf32> to vector<8x1xf32>
    %426 = vector.broadcast %425 : vector<8x1xf32> to vector<8x256xf32>
    %427 = arith.select %377, %426, %372 : vector<8x256xi1>, vector<8x256xf32>
    %428 = arith.subf %0, %382 : vector<8x256xf32>
    %429 = arith.divf %428, %387 : vector<8x256xf32>
    %430 = arith.subf %392, %429 : vector<8x256xf32>
    %cst_12 = arith.constant 0.000000e+00 : f32
    %431 = vector.broadcast %cst_12 : f32 to vector<8x256xf32>
    %432 = arith.subf %431, %430 : vector<8x256xf32>
    %cst_13 = arith.constant 1.000000e+00 : f32
    %433 = vector.broadcast %cst_13 : f32 to vector<8x256xf32>
    %434 = arith.subf %433, %429 : vector<8x256xf32>
    %435 = arith.cmpf ole, %429, %392 : vector<8x256xf32>
    %436 = arith.mulf %397, %430 : vector<8x256xf32>
    %437 = arith.mulf %412, %429 : vector<8x256xf32>
    %438 = arith.addf %436, %437 : vector<8x256xf32>
    %439 = arith.mulf %412, %434 : vector<8x256xf32>
    %440 = arith.mulf %417, %432 : vector<8x256xf32>
    %441 = arith.addf %439, %440 : vector<8x256xf32>
    %442 = arith.select %435, %438, %441 : vector<8x256xi1>, vector<8x256xf32>
    %443 = arith.mulf %402, %429 : vector<8x256xf32>
    %444 = arith.addf %430, %443 : vector<8x256xf32>
    %445 = arith.mulf %402, %434 : vector<8x256xf32>
    %446 = arith.mulf %407, %432 : vector<8x256xf32>
    %447 = arith.addf %445, %446 : vector<8x256xf32>
    %448 = arith.select %435, %444, %447 : vector<8x256xi1>, vector<8x256xf32>
    %cst_14 = arith.constant 1.000000e+00 : f32
    %449 = vector.broadcast %cst_14 : f32 to vector<8x256xf32>
    %450 = arith.divf %449, %448 : vector<8x256xf32>
    %451 = arith.mulf %442, %450 : vector<8x256xf32>
    %452 = arith.select %435, %422, %427 : vector<8x256xi1>, vector<8x256xf32>
    %453 = arith.mulf %452, %450 : vector<8x256xf32>
    %454 = arith.mulf %453, %450 : vector<8x256xf32>
    %455 = math.log %454 : vector<8x256xf32>
    %cst_15 = arith.constant -3.000000e+00 : f32
    %456 = vector.broadcast %cst_15 : f32 to vector<8x256xf32>
    %457 = arith.cmpf oge, %0, %456 : vector<8x256xf32>
    %cst_16 = arith.constant 3.000000e+00 : f32
    %458 = vector.broadcast %cst_16 : f32 to vector<8x256xf32>
    %459 = arith.cmpf ole, %0, %458 : vector<8x256xf32>
    %460 = arith.andi %457, %459 : vector<8x256xi1>
    %461 = arith.select %460, %451, %0 : vector<8x256xi1>, vector<8x256xf32>
    %cst_17 = arith.constant 0.000000e+00 : f32
    %462 = vector.broadcast %cst_17 : f32 to vector<8x256xf32>
    %463 = arith.select %460, %455, %462 : vector<8x256xi1>, vector<8x256xf32>
    %c0_18 = arith.constant 0 : index
    %c0_19 = arith.constant 0 : index
    %464 = vector.load %arg4[%c0_18, %c0_19] : memref<8x256xf32, #tpu.memory_space<vmem>>, vector<8x256xf32>
    tpu.vector_store %arg4[%c0_18, %c0_19], %461 {strides = array<i32>} : memref<8x256xf32, #tpu.memory_space<vmem>>, vector<8x256xf32>,
    %cst_20 = arith.constant dense<0.000000e+00> : vector<256xf32>
    %465 = vector.multi_reduction <add>, %463, %cst_20 [0] : vector<8x256xf32> to vector<256xf32>
    %466 = vector.shape_cast %465 : vector<256xf32> to vector<1x256xf32>
    %c0_21 = arith.constant 0 : index
    %c0_22 = arith.constant 0 : index
    %467 = vector.load %arg5[%c0_21, %c0_22] : memref<1x256xf32, #tpu.memory_space<vmem>>, vector<1x256xf32>
    tpu.vector_store %arg5[%c0_21, %c0_22], %466 {strides = array<i32>} : memref<1x256xf32, #tpu.memory_space<vmem>>, vector<1x256xf32>,
    return
  }
  func.func @transform_0(%arg0: i32) -> (i32, i32) {
    %c0_i32 = arith.constant 0 : i32
    %c0_i32_0 = arith.constant 0 : i32
    return %c0_i32, %arg0 : i32, i32
  }
  func.func @transform_1(%arg0: i32) -> (i32, i32) {
    %c0_i32 = arith.constant 0 : i32
    %c0_i32_0 = arith.constant 0 : i32
    %c0_i32_1 = arith.constant 0 : i32
    return %c0_i32, %c0_i32_0 : i32, i32
  }
  func.func @transform_2(%arg0: i32) -> (i32, i32, i32) {
    %c0_i32 = arith.constant 0 : i32
    %c0_i32_0 = arith.constant 0 : i32
    %c0_i32_1 = arith.constant 0 : i32
    %c0_i32_2 = arith.constant 0 : i32
    return %c0_i32, %c0_i32_0, %c0_i32_1 : i32, i32, i32
  }
  func.func @transform_3(%arg0: i32) -> (i32, i32) {
    %c0_i32 = arith.constant 0 : i32
    %c0_i32_0 = arith.constant 0 : i32
    return %c0_i32, %arg0 : i32, i32
  }
  func.func @transform_4(%arg0: i32) -> (i32, i32) {
    %c0_i32 = arith.constant 0 : i32
    %c0_i32_0 = arith.constant 0 : i32
    return %c0_i32, %arg0 : i32, i32
  }
}

</mosaic_0001>

<llo_original>
// kernel: tpu_custom_call.1
$region0: #{tpu_custom_call.1}
  #allocation0 [shape = 'u32[]', space=smem, size = 0x4, offset = 0x4, fixed_abs, tag = 'smem constant byte address 0x4 - core index']
  #allocation1 [shape = 'u32[144,128]{1,0:T(1,128)}', space=vmem, size = 0x12000, scoped, tag = 'internal scratch']
  %s0 = inlined_call_operand.vmem [shape: f32[8,256], index: 0, kind: input, shape index: {}]
  %s1 = inlined_call_operand.vmem [shape: f32[8,9], index: 1, kind: input, shape index: {}]
  %s2 = inlined_call_operand.vmem [shape: f32[10,8,8], index: 2, kind: input, shape index: {}]
  %s3 = inlined_call_operand.hbm [shape: f32[8,256], index: 3, kind: output, shape index: {0}]
  %s4 = inlined_call_operand.hbm [shape: f32[1,256], index: 4, kind: output, shape index: {1}]
  %5 = xla_tuple %s3, %s4
  %s6 = sld [smem:[#allocation0]]
  $region30: #{tpu_custom_call.1} parent=0
    _
  %s8 = ssub.s32 1, %s6
  %s9 = scalar_select 0, %s8, %s6
  $region1: #{tpu_custom_call.1} parent=0
    #allocation2 [shape = 'u8[8192]{0}', space=vmem, size = 0x2000, scoped, tag = 'output window, operand 0, single buffered']
    #allocation3 [shape = 's32[1]{0}', space=sflag, size = 0x4, scoped, tag = 'scoped memory for tpu_custom_call.1']
    #allocation4 [shape = 'u8[1024]{0}', space=vmem, size = 0x400, scoped, tag = 'output window, operand 1, single buffered']
    #allocation5 [shape = 's32[1]{0}', space=sflag, size = 0x4, scoped, tag = 'scoped memory for tpu_custom_call.1']
    %10 = vsyncpa [#allocation3], 0
    %11 = vsyncpa [#allocation5], 0
    // Predicated region
    $region2: #{tpu_custom_call.1} parent=1 // pred_check
      _
    $region3: #{tpu_custom_call.1} parent=1 // pred_check_branch
      %13 = sbr.rel (0) target = $region5
    $region4: #{tpu_custom_call.1} parent=1 // pred_region
      _
    $region5: #{tpu_custom_call.1} parent=1 // pred_fallthru
      _
    // Predicated region
    $region6: #{tpu_custom_call.1} parent=1 // pred_check
      _
    $region7: #{tpu_custom_call.1} parent=1 // pred_check_branch
      %15 = sbr.rel (0) target = $region9
    $region8: #{tpu_custom_call.1} parent=1 // pred_region
      _
    $region9: #{tpu_custom_call.1} parent=1 // pred_fallthru
      _
    // Predicated region
    $region10: #{tpu_custom_call.1} parent=1 // pred_check
      _
    $region11: #{tpu_custom_call.1} parent=1 // pred_check_branch
      %17 = sbr.rel (0) target = $region13
    $region12: #{tpu_custom_call.1} parent=1 // pred_region
      _
    $region13: #{tpu_custom_call.1} parent=1 // pred_fallthru
      _
    %v18 = vld [vmem:[%s0] sm:$0xff]
    %v19 = vld [vmem:[%s0 + $0x8] sm:$0xff]
    %v20 = vld [vmem:[%s1] sm:$0xff]
    %v21 = vld [vmem:[%s2] sm:$0xff]
    %v22 = vld [vmem:[%s2 + $0x8] sm:$0xff]
    %v23 = vld [vmem:[%s2 + $0x10] sm:$0xff]
    %v24 = vld [vmem:[%s2 + $0x18] sm:$0xff]
    %v25 = vld [vmem:[%s2 + $0x20] sm:$0xff]
    %v26 = vld [vmem:[%s2 + $0x28] sm:$0xff]
    %v27 = vld [vmem:[%s2 + $0x30] sm:$0xff]
    %v28 = vld [vmem:[%s2 + $0x38] sm:$0xff]
    %v29 = vld [vmem:[%s2 + $0x40] sm:$0xff]
    %v30 = vld [vmem:[%s2 + $0x48] sm:$0xff]
    %32 = vset.pattern.permute.xlu0 0
    %33 = vperm.xlu0 %32, %v21
    %v34 = vpop.permute.xlu0 %33
    %37 = vset.pattern.permute.xlu0 0
    %38 = vperm.xlu0 %37, %v22
    %v39 = vpop.permute.xlu0 %38
    %42 = vset.pattern.permute.xlu0 0
    %43 = vperm.xlu0 %42, %v23
    %v44 = vpop.permute.xlu0 %43
    %47 = vset.pattern.permute.xlu0 0
    %48 = vperm.xlu0 %47, %v24
    %v49 = vpop.permute.xlu0 %48
    %52 = vset.pattern.permute.xlu0 0
    %53 = vperm.xlu0 %52, %v25
    %v54 = vpop.permute.xlu0 %53
    %57 = vset.pattern.permute.xlu0 0
    %58 = vperm.xlu0 %57, %v26
    %v59 = vpop.permute.xlu0 %58
    %62 = vset.pattern.permute.xlu0 0
    %63 = vperm.xlu0 %62, %v27
    %v64 = vpop.permute.xlu0 %63
    %67 = vset.pattern.permute.xlu0 0
    %68 = vperm.xlu0 %67, %v28
    %v69 = vpop.permute.xlu0 %68
    %72 = vset.pattern.permute.xlu0 0
    %73 = vperm.xlu0 %72, %v29
    %v74 = vpop.permute.xlu0 %73
    %77 = vset.pattern.permute.xlu0 0
    %78 = vperm.xlu0 %77, %v30
    %v79 = vpop.permute.xlu0 %78
    %v81 = vadd.f32 %v20, 1e-06
    %83 = vset.pattern.permute.xlu0 1
    %84 = vperm.xlu0 %83, %v81
    %v85 = vpop.permute.xlu0 %84
    %vm87 = vcmp.ge.f32.partialorder %v18, %v85
    %vm88 = vcmp.ge.f32.partialorder %v19, %v85
    %89 = vset.pattern.permute.xlu0 1
    %90 = vperm.xlu0 %89, %v21
    %v91 = vpop.permute.xlu0 %90
    %v93 = vsel %vm87, %v91, %v34
    %v94 = vsel %vm88, %v91, %v34
    %95 = vset.pattern.permute.xlu0 1
    %96 = vperm.xlu0 %95, %v22
    %v97 = vpop.permute.xlu0 %96
    %v99 = vsel %vm87, %v97, %v39
    %v100 = vsel %vm88, %v97, %v39
    %101 = vset.pattern.permute.xlu0 1
    %102 = vperm.xlu0 %101, %v23
    %v103 = vpop.permute.xlu0 %102
    %v105 = vsel %vm87, %v103, %v44
    %v106 = vsel %vm88, %v103, %v44
    %107 = vset.pattern.permute.xlu0 1
    %108 = vperm.xlu0 %107, %v24
    %v109 = vpop.permute.xlu0 %108
    %v111 = vsel %vm87, %v109, %v49
    %v112 = vsel %vm88, %v109, %v49
    %113 = vset.pattern.permute.xlu0 1
    %114 = vperm.xlu0 %113, %v25
    %v115 = vpop.permute.xlu0 %114
    %v117 = vsel %vm87, %v115, %v54
    %v118 = vsel %vm88, %v115, %v54
    %119 = vset.pattern.permute.xlu0 1
    %120 = vperm.xlu0 %119, %v26
    %v121 = vpop.permute.xlu0 %120
    %v123 = vsel %vm87, %v121, %v59
    %v124 = vsel %vm88, %v121, %v59
    %125 = vset.pattern.permute.xlu0 1
    %126 = vperm.xlu0 %125, %v27
    %v127 = vpop.permute.xlu0 %126
    %v129 = vsel %vm87, %v127, %v64
    %v130 = vsel %vm88, %v127, %v64
    %131 = vset.pattern.permute.xlu0 1
    %132 = vperm.xlu0 %131, %v28
    %v133 = vpop.permute.xlu0 %132
    %v135 = vsel %vm87, %v133, %v69
    %v136 = vsel %vm88, %v133, %v69
    %137 = vset.pattern.permute.xlu0 1
    %138 = vperm.xlu0 %137, %v29
    %v139 = vpop.permute.xlu0 %138
    %v141 = vsel %vm87, %v139, %v74
    %v142 = vsel %vm88, %v139, %v74
    %143 = vset.pattern.permute.xlu0 1
    %144 = vperm.xlu0 %143, %v30
    %v145 = vpop.permute.xlu0 %144
    %v147 = vsel %vm87, %v145, %v79
    %v148 = vsel %vm88, %v145, %v79
    %149 = vset.pattern.permute.xlu0 2
    %150 = vperm.xlu0 %149, %v81
    %v151 = vpop.permute.xlu0 %150
    %vm153 = vcmp.ge.f32.partialorder %v18, %v151
    %vm154 = vcmp.ge.f32.partialorder %v19, %v151
    %155 = vset.pattern.permute.xlu0 2
    %156 = vperm.xlu0 %155, %v21
    %v157 = vpop.permute.xlu0 %156
    %v159 = vsel %vm153, %v157, %v93
    %v160 = vsel %vm154, %v157, %v94
    %161 = vset.pattern.permute.xlu0 2
    %162 = vperm.xlu0 %161, %v22
    %v163 = vpop.permute.xlu0 %162
    %v165 = vsel %vm153, %v163, %v99
    %v166 = vsel %vm154, %v163, %v100
    %167 = vset.pattern.permute.xlu0 2
    %168 = vperm.xlu0 %167, %v23
    %v169 = vpop.permute.xlu0 %168
    %v171 = vsel %vm153, %v169, %v105
    %v172 = vsel %vm154, %v169, %v106
    %173 = vset.pattern.permute.xlu0 2
    %174 = vperm.xlu0 %173, %v24
    %v175 = vpop.permute.xlu0 %174
    %v177 = vsel %vm153, %v175, %v111
    %v178 = vsel %vm154, %v175, %v112
    %179 = vset.pattern.permute.xlu0 2
    %180 = vperm.xlu0 %179, %v25
    %v181 = vpop.permute.xlu0 %180
    %v183 = vsel %vm153, %v181, %v117
    %v184 = vsel %vm154, %v181, %v118
    %185 = vset.pattern.permute.xlu0 2
    %186 = vperm.xlu0 %185, %v26
    %v187 = vpop.permute.xlu0 %186
    %v189 = vsel %vm153, %v187, %v123
    %v190 = vsel %vm154, %v187, %v124
    %191 = vset.pattern.permute.xlu0 2
    %192 = vperm.xlu0 %191, %v27
    %v193 = vpop.permute.xlu0 %192
    %v195 = vsel %vm153, %v193, %v129
    %v196 = vsel %vm154, %v193, %v130
    %197 = vset.pattern.permute.xlu0 2
    %198 = vperm.xlu0 %197, %v28
    %v199 = vpop.permute.xlu0 %198
    %v201 = vsel %vm153, %v199, %v135
    %v202 = vsel %vm154, %v199, %v136
    %203 = vset.pattern.permute.xlu0 2
    %204 = vperm.xlu0 %203, %v29
    %v205 = vpop.permute.xlu0 %204
    %v207 = vsel %vm153, %v205, %v141
    %v208 = vsel %vm154, %v205, %v142
    %209 = vset.pattern.permute.xlu0 2
    %210 = vperm.xlu0 %209, %v30
    %v211 = vpop.permute.xlu0 %210
    %v213 = vsel %vm153, %v211, %v147
    %v214 = vsel %vm154, %v211, %v148
    %215 = vset.pattern.permute.xlu0 3
    %216 = vperm.xlu0 %215, %v81
    %v217 = vpop.permute.xlu0 %216
    %vm219 = vcmp.ge.f32.partialorder %v18, %v217
    %vm220 = vcmp.ge.f32.partialorder %v19, %v217
    %221 = vset.pattern.permute.xlu0 3
    %222 = vperm.xlu0 %221, %v21
    %v223 = vpop.permute.xlu0 %222
    %v225 = vsel %vm219, %v223, %v159
    %v226 = vsel %vm220, %v223, %v160
    %227 = vset.pattern.permute.xlu0 3
    %228 = vperm.xlu0 %227, %v22
    %v229 = vpop.permute.xlu0 %228
    %v231 = vsel %vm219, %v229, %v165
    %v232 = vsel %vm220, %v229, %v166
    %233 = vset.pattern.permute.xlu0 3
    %234 = vperm.xlu0 %233, %v23
    %v235 = vpop.permute.xlu0 %234
    %v237 = vsel %vm219, %v235, %v171
    %v238 = vsel %vm220, %v235, %v172
    %239 = vset.pattern.permute.xlu0 3
    %240 = vperm.xlu0 %239, %v24
    %v241 = vpop.permute.xlu0 %240
    %v243 = vsel %vm219, %v241, %v177
    %v244 = vsel %vm220, %v241, %v178
    %245 = vset.pattern.permute.xlu0 3
    %246 = vperm.xlu0 %245, %v25
    %v247 = vpop.permute.xlu0 %246
    %v249 = vsel %vm219, %v247, %v183
    %v250 = vsel %vm220, %v247, %v184
    %251 = vset.pattern.permute.xlu0 3
    %252 = vperm.xlu0 %251, %v26
    %v253 = vpop.permute.xlu0 %252
    %v255 = vsel %vm219, %v253, %v189
    %v256 = vsel %vm220, %v253, %v190
    %257 = vset.pattern.permute.xlu0 3
    %258 = vperm.xlu0 %257, %v27
    %v259 = vpop.permute.xlu0 %258
    %v261 = vsel %vm219, %v259, %v195
    %v262 = vsel %vm220, %v259, %v196
    %263 = vset.pattern.permute.xlu0 3
    %264 = vperm.xlu0 %263, %v28
    %v265 = vpop.permute.xlu0 %264
    %v267 = vsel %vm219, %v265, %v201
    %v268 = vsel %vm220, %v265, %v202
    %269 = vset.pattern.permute.xlu0 3
    %270 = vperm.xlu0 %269, %v29
    %v271 = vpop.permute.xlu0 %270
    %v273 = vsel %vm219, %v271, %v207
    %v274 = vsel %vm220, %v271, %v208
    %275 = vset.pattern.permute.xlu0 3
    %276 = vperm.xlu0 %275, %v30
    %v277 = vpop.permute.xlu0 %276
    %v279 = vsel %vm219, %v277, %v213
    %v280 = vsel %vm220, %v277, %v214
    %281 = vset.pattern.permute.xlu0 4
    %282 = vperm.xlu0 %281, %v81
    %v283 = vpop.permute.xlu0 %282
    %vm285 = vcmp.ge.f32.partialorder %v18, %v283
    %vm286 = vcmp.ge.f32.partialorder %v19, %v283
    %287 = vset.pattern.permute.xlu0 4
    %288 = vperm.xlu0 %287, %v21
    %v289 = vpop.permute.xlu0 %288
    %v291 = vsel %vm285, %v289, %v225
    %v292 = vsel %vm286, %v289, %v226
    %293 = vset.pattern.permute.xlu0 4
    %294 = vperm.xlu0 %293, %v22
    %v295 = vpop.permute.xlu0 %294
    %v297 = vsel %vm285, %v295, %v231
    %v298 = vsel %vm286, %v295, %v232
    %299 = vset.pattern.permute.xlu0 4
    %300 = vperm.xlu0 %299, %v23
    %v301 = vpop.permute.xlu0 %300
    %v303 = vsel %vm285, %v301, %v237
    %v304 = vsel %vm286, %v301, %v238
    %305 = vset.pattern.permute.xlu0 4
    %306 = vperm.xlu0 %305, %v24
    %v307 = vpop.permute.xlu0 %306
    %v309 = vsel %vm285, %v307, %v243
    %v310 = vsel %vm286, %v307, %v244
    %311 = vset.pattern.permute.xlu0 4
    %312 = vperm.xlu0 %311, %v25
    %v313 = vpop.permute.xlu0 %312
    %v315 = vsel %vm285, %v313, %v249
    %v316 = vsel %vm286, %v313, %v250
    %317 = vset.pattern.permute.xlu0 4
    %318 = vperm.xlu0 %317, %v26
    %v319 = vpop.permute.xlu0 %318
    %v321 = vsel %vm285, %v319, %v255
    %v322 = vsel %vm286, %v319, %v256
    %323 = vset.pattern.permute.xlu0 4
    %324 = vperm.xlu0 %323, %v27
    %v325 = vpop.permute.xlu0 %324
    %v327 = vsel %vm285, %v325, %v261
    %v328 = vsel %vm286, %v325, %v262
    %329 = vset.pattern.permute.xlu0 4
    %330 = vperm.xlu0 %329, %v28
    %v331 = vpop.permute.xlu0 %330
    %v333 = vsel %vm285, %v331, %v267
    %v334 = vsel %vm286, %v331, %v268
    %335 = vset.pattern.permute.xlu0 4
    %336 = vperm.xlu0 %335, %v29
    %v337 = vpop.permute.xlu0 %336
    %v339 = vsel %vm285, %v337, %v273
    %v340 = vsel %vm286, %v337, %v274
    %341 = vset.pattern.permute.xlu0 4
    %342 = vperm.xlu0 %341, %v30
    %v343 = vpop.permute.xlu0 %342
    %v345 = vsel %vm285, %v343, %v279
    %v346 = vsel %vm286, %v343, %v280
    %347 = vset.pattern.permute.xlu0 5
    %348 = vperm.xlu0 %347, %v81
    %v349 = vpop.permute.xlu0 %348
    %vm351 = vcmp.ge.f32.partialorder %v18, %v349
    %vm352 = vcmp.ge.f32.partialorder %v19, %v349
    %353 = vset.pattern.permute.xlu0 5
    %354 = vperm.xlu0 %353, %v21
    %v355 = vpop.permute.xlu0 %354
    %v357 = vsel %vm351, %v355, %v291
    %v358 = vsel %vm352, %v355, %v292
    %359 = vset.pattern.permute.xlu0 5
    %360 = vperm.xlu0 %359, %v22
    %v361 = vpop.permute.xlu0 %360
    %v363 = vsel %vm351, %v361, %v297
    %v364 = vsel %vm352, %v361, %v298
    %365 = vset.pattern.permute.xlu0 5
    %366 = vperm.xlu0 %365, %v23
    %v367 = vpop.permute.xlu0 %366
    %v369 = vsel %vm351, %v367, %v303
    %v370 = vsel %vm352, %v367, %v304
    %371 = vset.pattern.permute.xlu0 5
    %372 = vperm.xlu0 %371, %v24
    %v373 = vpop.permute.xlu0 %372
    %v375 = vsel %vm351, %v373, %v309
    %v376 = vsel %vm352, %v373, %v310
    %377 = vset.pattern.permute.xlu0 5
    %378 = vperm.xlu0 %377, %v25
    %v379 = vpop.permute.xlu0 %378
    %v381 = vsel %vm351, %v379, %v315
    %v382 = vsel %vm352, %v379, %v316
    %383 = vset.pattern.permute.xlu0 5
    %384 = vperm.xlu0 %383, %v26
    %v385 = vpop.permute.xlu0 %384
    %v387 = vsel %vm351, %v385, %v321
    %v388 = vsel %vm352, %v385, %v322
    %389 = vset.pattern.permute.xlu0 5
    %390 = vperm.xlu0 %389, %v27
    %v391 = vpop.permute.xlu0 %390
    %v393 = vsel %vm351, %v391, %v327
    %v394 = vsel %vm352, %v391, %v328
    %395 = vset.pattern.permute.xlu0 5
    %396 = vperm.xlu0 %395, %v28
    %v397 = vpop.permute.xlu0 %396
    %v399 = vsel %vm351, %v397, %v333
    %v400 = vsel %vm352, %v397, %v334
    %401 = vset.pattern.permute.xlu0 5
    %402 = vperm.xlu0 %401, %v29
    %v403 = vpop.permute.xlu0 %402
    %v405 = vsel %vm351, %v403, %v339
    %v406 = vsel %vm352, %v403, %v340
    %407 = vset.pattern.permute.xlu0 5
    %408 = vperm.xlu0 %407, %v30
    %v409 = vpop.permute.xlu0 %408
    %v411 = vsel %vm351, %v409, %v345
    %v412 = vsel %vm352, %v409, %v346
    %413 = vset.pattern.permute.xlu0 6
    %414 = vperm.xlu0 %413, %v81
    %v415 = vpop.permute.xlu0 %414
    %vm417 = vcmp.ge.f32.partialorder %v18, %v415
    %vm418 = vcmp.ge.f32.partialorder %v19, %v415
    %419 = vset.pattern.permute.xlu0 6
    %420 = vperm.xlu0 %419, %v21
    %v421 = vpop.permute.xlu0 %420
    %v423 = vsel %vm417, %v421, %v357
    %v424 = vsel %vm418, %v421, %v358
    %425 = vset.pattern.permute.xlu0 6
    %426 = vperm.xlu0 %425, %v22
    %v427 = vpop.permute.xlu0 %426
    %v429 = vsel %vm417, %v427, %v363
    %v430 = vsel %vm418, %v427, %v364
    %431 = vset.pattern.permute.xlu0 6
    %432 = vperm.xlu0 %431, %v23
    %v433 = vpop.permute.xlu0 %432
    %v435 = vsel %vm417, %v433, %v369
    %v436 = vsel %vm418, %v433, %v370
    %437 = vset.pattern.permute.xlu0 6
    %438 = vperm.xlu0 %437, %v24
    %v439 = vpop.permute.xlu0 %438
    %v441 = vsel %vm417, %v439, %v375
    %v442 = vsel %vm418, %v439, %v376
    %443 = vset.pattern.permute.xlu0 6
    %444 = vperm.xlu0 %443, %v25
    %v445 = vpop.permute.xlu0 %444
    %v447 = vsel %vm417, %v445, %v381
    %v448 = vsel %vm418, %v445, %v382
    %449 = vset.pattern.permute.xlu0 6
    %450 = vperm.xlu0 %449, %v26
    %v451 = vpop.permute.xlu0 %450
    %v453 = vsel %vm417, %v451, %v387
    %v454 = vsel %vm418, %v451, %v388
    %455 = vset.pattern.permute.xlu0 6
    %456 = vperm.xlu0 %455, %v27
    %v457 = vpop.permute.xlu0 %456
    %v459 = vsel %vm417, %v457, %v393
    %v460 = vsel %vm418, %v457, %v394
    %461 = vset.pattern.permute.xlu0 6
    %462 = vperm.xlu0 %461, %v28
    %v463 = vpop.permute.xlu0 %462
    %v465 = vsel %vm417, %v463, %v399
    %v466 = vsel %vm418, %v463, %v400
    %467 = vset.pattern.permute.xlu0 6
    %468 = vperm.xlu0 %467, %v29
    %v469 = vpop.permute.xlu0 %468
    %v471 = vsel %vm417, %v469, %v405
    %v472 = vsel %vm418, %v469, %v406
    %473 = vset.pattern.permute.xlu0 6
    %474 = vperm.xlu0 %473, %v30
    %v475 = vpop.permute.xlu0 %474
    %v477 = vsel %vm417, %v475, %v411
    %v478 = vsel %vm418, %v475, %v412
    %479 = vset.pattern.permute.xlu0 7
    %480 = vperm.xlu0 %479, %v81
    %v481 = vpop.permute.xlu0 %480
    %vm483 = vcmp.ge.f32.partialorder %v18, %v481
    %vm484 = vcmp.ge.f32.partialorder %v19, %v481
    %485 = vset.pattern.permute.xlu0 7
    %486 = vperm.xlu0 %485, %v21
    %v487 = vpop.permute.xlu0 %486
    %v489 = vsel %vm483, %v487, %v423
    %v490 = vsel %vm484, %v487, %v424
    %491 = vset.pattern.permute.xlu0 7
    %492 = vperm.xlu0 %491, %v22
    %v493 = vpop.permute.xlu0 %492
    %v495 = vsel %vm483, %v493, %v429
    %v496 = vsel %vm484, %v493, %v430
    %497 = vset.pattern.permute.xlu0 7
    %498 = vperm.xlu0 %497, %v23
    %v499 = vpop.permute.xlu0 %498
    %v501 = vsel %vm483, %v499, %v435
    %v502 = vsel %vm484, %v499, %v436
    %503 = vset.pattern.permute.xlu0 7
    %504 = vperm.xlu0 %503, %v24
    %v505 = vpop.permute.xlu0 %504
    %v507 = vsel %vm483, %v505, %v441
    %v508 = vsel %vm484, %v505, %v442
    %509 = vset.pattern.permute.xlu0 7
    %510 = vperm.xlu0 %509, %v25
    %v511 = vpop.permute.xlu0 %510
    %v513 = vsel %vm483, %v511, %v447
    %v514 = vsel %vm484, %v511, %v448
    %515 = vset.pattern.permute.xlu0 7
    %516 = vperm.xlu0 %515, %v26
    %v517 = vpop.permute.xlu0 %516
    %v519 = vsel %vm483, %v517, %v453
    %v520 = vsel %vm484, %v517, %v454
    %521 = vset.pattern.permute.xlu0 7
    %522 = vperm.xlu0 %521, %v27
    %v523 = vpop.permute.xlu0 %522
    %v525 = vsel %vm483, %v523, %v459
    %v526 = vsel %vm484, %v523, %v460
    %527 = vset.pattern.permute.xlu0 7
    %528 = vperm.xlu0 %527, %v28
    %v529 = vpop.permute.xlu0 %528
    %v531 = vsel %vm483, %v529, %v465
    %v532 = vsel %vm484, %v529, %v466
    %533 = vset.pattern.permute.xlu0 7
    %534 = vperm.xlu0 %533, %v29
    %v535 = vpop.permute.xlu0 %534
    %v537 = vsel %vm483, %v535, %v471
    %v538 = vsel %vm484, %v535, %v472
    %539 = vset.pattern.permute.xlu0 7
    %540 = vperm.xlu0 %539, %v30
    %v541 = vpop.permute.xlu0 %540
    %v543 = vsel %vm483, %v541, %v477
    %v544 = vsel %vm484, %v541, %v478
    %v545 = vsub.f32 %v18, %v489
    %v546 = vsub.f32 %v19, %v490
    %v547 = vrcp.pop %v495
    %v548 = vmul.f32 %v545, %v547
    %v549 = vrcp.pop %v496
    %v550 = vmul.f32 %v546, %v549
    %v551 = vsub.f32 %v501, %v548
    %v552 = vsub.f32 %v502, %v550
    %v553 = vsub.f32 0.0, %v551
    %v554 = vsub.f32 0.0, %v552
    %v555 = vsub.f32 1.0, %v548
    %v556 = vsub.f32 1.0, %v550
    %vm557 = vcmp.le.f32.partialorder %v548, %v501
    %vm558 = vcmp.le.f32.partialorder %v550, %v502
    %v559 = vmul.f32 %v507, %v551
    %v560 = vmul.f32 %v508, %v552
    %v561 = vmul.f32 %v525, %v548
    %v562 = vmul.f32 %v526, %v550
    %v563 = vadd.f32 %v559, %v561
    %v564 = vadd.f32 %v560, %v562
    %v565 = vmul.f32 %v525, %v555
    %v566 = vmul.f32 %v526, %v556
    %v567 = vmul.f32 %v531, %v553
    %v568 = vmul.f32 %v532, %v554
    %v569 = vadd.f32 %v565, %v567
    %v570 = vadd.f32 %v566, %v568
    %v571 = vsel %vm557, %v563, %v569
    %v572 = vsel %vm558, %v564, %v570
    %v573 = vmul.f32 %v513, %v548
    %v574 = vmul.f32 %v514, %v550
    %v575 = vadd.f32 %v551, %v573
    %v576 = vadd.f32 %v552, %v574
    %v577 = vmul.f32 %v513, %v555
    %v578 = vmul.f32 %v514, %v556
    %v579 = vmul.f32 %v519, %v553
    %v580 = vmul.f32 %v520, %v554
    %v581 = vadd.f32 %v577, %v579
    %v582 = vadd.f32 %v578, %v580
    %v583 = vsel %vm557, %v575, %v581
    %v584 = vsel %vm558, %v576, %v582
    %v585 = vrcp.pop %v583
    %v586 = vmul.f32 1.0, %v585
    %v587 = vrcp.pop %v584
    %v588 = vmul.f32 1.0, %v587
    %v589 = vmul.f32 %v571, %v586
    %v590 = vmul.f32 %v572, %v588
    %v591 = vsel %vm557, %v537, %v543
    %v592 = vsel %vm558, %v538, %v544
    %v593 = vmul.f32 %v591, %v586
    %v594 = vmul.f32 %v592, %v588
    %v595 = vmul.f32 %v593, %v586
    %v596 = vmul.f32 %v594, %v588
    %v597 = vlog2.pop %v595
    %v598 = vmul.f32 %v597, 0.6931472
    %v599 = vlog2.pop %v596
    %v600 = vmul.f32 %v599, 0.6931472
    %vm601 = vcmp.ge.f32.partialorder %v18, -3.0
    %vm602 = vcmp.ge.f32.partialorder %v19, -3.0
    %vm603 = vcmp.le.f32.partialorder %v18, 3.0
    %vm604 = vcmp.le.f32.partialorder %v19, 3.0
    %vm605 = vmand %vm601, %vm603
    %vm606 = vmand %vm602, %vm604
    %v607 = vsel %vm605, %v589, %v18
    %v608 = vsel %vm606, %v590, %v19
    %v609 = vsel %vm605, %v598, 0.0
    %v610 = vsel %vm606, %v600, 0.0
    %611 = vst [vmem:[#allocation2] sm:$0xff] %v607
    %612 = vst [vmem:[#allocation2 + $0x8] sm:$0xff] %v608
    %v613 = vrot.slane %v609, 4
    %v614 = vadd.f32 %v609, %v613
    %v615 = vrot.slane %v614, 2
    %v616 = vadd.f32 %v614, %v615
    %v617 = vrot.slane %v616, 1
    %v618 = vadd.f32 %v616, %v617
    %v619 = vrot.slane %v610, 4
    %v620 = vadd.f32 %v610, %v619
    %v621 = vrot.slane %v620, 2
    %v622 = vadd.f32 %v620, %v621
    %v623 = vrot.slane %v622, 1
    %v624 = vadd.f32 %v622, %v623
    %v627 = vcombine.low %v618, %v624
    %v629 = vunpack.c.l.s4 1966171168
    %v630 = vunpack.c.0.s8 %v629
    %v631 = vlaneseq
    %v632 = vshrl.u32 %v631, 7
    %v633 = vsub.s32 %v630, %v632
    %v634 = vrot.slane %v627, %v633
    %v636 = vunpack.c.l.s4 1966171168
    %v637 = vunpack.c.0.s8 %v636
    %v638 = vlaneseq
    %v639 = vshrl.u32 %v638, 7
    %v640 = vsub.s32 %v637, %v639
    %v641 = vrot.slane %v634, %v640
    %v643 = vlaneseq
    %vm644 = vcmp.ge.s32.totalorder %v643, 0
    %vm645 = vcmp.lt.s32.totalorder %v643, 256
    %vm646 = vmand %vm644, %vm645
    %647 = vst.msk [vmem:[#allocation4] sm:$0x3] %vm646, %v641
    // Predicated region
    $region14: #{tpu_custom_call.1} parent=1 // pred_check
      _
    $region15: #{tpu_custom_call.1} parent=1 // pred_check_branch
      %649 = sbr.rel (0) target = $region17
    $region16: #{tpu_custom_call.1} parent=1 // pred_region
      %s651 = ssub.s32 256, 256
      %652 = vsyncadd [#allocation3], %s651
      %s654 = sshll.u32 [#allocation2], 4
      %s655 = int_to_ptr.vmem [resolvable:$true] %s654
      %657 = dma.vmem_to_hbm [thread:$0]  %s655, 256, %s3, [#allocation3]
    $region17: #{tpu_custom_call.1} parent=1 // pred_fallthru
      _
    // Predicated region
    $region18: #{tpu_custom_call.1} parent=1 // pred_check
      _
    $region19: #{tpu_custom_call.1} parent=1 // pred_check_branch
      %659 = sbr.rel (0) target = $region21
    $region20: #{tpu_custom_call.1} parent=1 // pred_region
      %s661 = ssub.s32 32, 32
      %662 = vsyncadd [#allocation5], %s661
      %s664 = sshll.u32 [#allocation4], 4
      %s665 = int_to_ptr.vmem [resolvable:$true] %s664
      %667 = dma.vmem_to_hbm [thread:$0]  %s665, 32, %s4, [#allocation5]
    $region21: #{tpu_custom_call.1} parent=1 // pred_fallthru
      _
    // Predicated region
    $region22: #{tpu_custom_call.1} parent=1 // pred_check
      _
    $region23: #{tpu_custom_call.1} parent=1 // pred_check_branch
      %669 = sbr.rel (0) target = $region25
    $region24: #{tpu_custom_call.1} parent=1 // pred_region
      %670 = dma.done [#allocation3], 256
    $region25: #{tpu_custom_call.1} parent=1 // pred_fallthru
      _
    // Predicated region
    $region26: #{tpu_custom_call.1} parent=1 // pred_check
      _
    $region27: #{tpu_custom_call.1} parent=1 // pred_check_branch
      %672 = sbr.rel (0) target = $region29
    $region28: #{tpu_custom_call.1} parent=1 // pred_region
      %673 = dma.done [#allocation5], 32
    $region29: #{tpu_custom_call.1} parent=1 // pred_fallthru
      _
    %674 = vsyncpa [#allocation3], 1
    %675 = vsyncpa [#allocation5], 1

</llo_original>
